<compile_context>
chip_gen: v7x
topology: tpu7x:2x2x1
jax: 0.10.0
libtpu: 0.0.40
codegen_flags: <defaults>
</compile_context>

<pallas_src>
import functools

import jax
import jax.numpy as jnp
from jax.experimental import pallas as pl
from jax.experimental.pallas import tpu as pltpu


# ----------------------------- Pallas kernel ------------------------------ #

def _lstm_encoder_kernel(n_layers, seq_len, n_hidden, batch_p, *refs):
    """Kernel body.

    in refs : x0(T*Bp, E)      time-major flattened embeddings (batch padded
                               to the sublane tile Bp),
              cats(Bp, C),
              h0(L, Bp, H), c0(L, Bp, H),
              [w_ih_t(E_in, 4H), w_hh_t(H, 4H), b(1, 4H)] * L
                  (pre-transposed, biases fused, g-gate columns pre-scaled x2),
              wd_h_t(H, tag), wd_c_t(C, tag), bd(1, tag)
    out refs: out(Bp, tag), h_out(L, Bp, H), c_out(L, Bp, H)
    """
    n_in = 4 + 3 * n_layers + 3
    in_refs = refs[:n_in]
    out_ref, h_out_ref, c_out_ref = refs[n_in:]

    x0_ref, cats_ref, h0_ref, c0_ref = in_refs[:4]
    layer_refs = in_refs[4:4 + 3 * n_layers]
    wdh_ref, wdc_ref, bd_ref = in_refs[4 + 3 * n_layers:]

    H, T, Bp = n_hidden, seq_len, batch_p
    f32 = jnp.float32

    # Current layer's time-major flattened input, (T*Bp, E_in).  Bp is a
    # multiple of the f32 sublane tile (8), so every per-step row chunk below
    # is a whole-tile slice.
    x_all = x0_ref[...].astype(f32)

    h = None
    for l in range(n_layers):
        w_ih_t = layer_refs[3 * l][...].astype(f32)       # (E_in, 4H)
        w_hh_t = layer_refs[3 * l + 1][...].astype(f32)   # (H, 4H)
        b_row = layer_refs[3 * l + 2][...].astype(f32)    # (1, 4H)

        # One batched MXU matmul per layer for the input projection, bias
        # folded in -> only h @ W_hh^T sits on the serial recurrence chain.
        xp = jnp.dot(x_all, w_ih_t, preferred_element_type=f32) + b_row  # (T*Bp,4H)

        h = h0_ref[l].astype(f32)                          # (Bp, H)
        c = c0_ref[l].astype(f32)

        last = (l == n_layers - 1)
        hs = []
        # T is small & static -> static unroll with fully static, tile-aligned
        # slices (equivalent to lax.fori_loop(unroll=True), no dynamic index).
        for t in range(T):
            gates = xp[t * Bp:(t + 1) * Bp, :] + jnp.dot(
                h, w_hh_t, preferred_element_type=f32)     # (Bp, 4H)
            # Single EUP push: tanh(z) == 2*sigmoid(2z) - 1; the x2 on the g
            # gate was folded into its weight/bias columns in the wrapper.
            sig = jax.nn.sigmoid(gates)
            i_g = sig[:, 0 * H:1 * H]
            f_g = sig[:, 1 * H:2 * H]
            g_g = 2.0 * sig[:, 2 * H:3 * H] - 1.0          # VPU fix-up (free)
            o_g = sig[:, 3 * H:4 * H]
            c = f_g * c + i_g * g_g
            h = o_g * jnp.tanh(c)
            if not last:                 # last layer never needs the sequence
                hs.append(h)             # register-resident, no VMEM store

        if not last:
            # Tile-aligned (Bp == sublane tile) concat -> next layer's batched
            # projection input, keeping the sequence out of VMEM entirely.
            x_all = jnp.concatenate(hs, axis=0)            # (T*Bp, H)

        h_out_ref[l] = h.astype(h_out_ref.dtype)
        c_out_ref[l] = c.astype(c_out_ref.dtype)

    # out = sigmoid(Linear(concat(out[:, -1, :], categories))) as split
    # (pre-transposed) matmuls -- mathematically identical to concat+Linear.
    # TODO(synk): nn.Dropout with p>0 in train mode would need PRNG masking;
    # module default dropout=0 is the identity, which is what we implement.
    cats = cats_ref[...].astype(f32)
    logits = (
        jnp.dot(h, wdh_ref[...].astype(f32), preferred_element_type=f32)
        + jnp.dot(cats, wdc_ref[...].astype(f32), preferred_element_type=f32)
        + bd_ref[...].astype(f32)
    )
    out_ref[...] = jax.nn.sigmoid(logits).astype(out_ref.dtype)


# ------------------------------- wrapper ----------------------------------- #

def lstm_sentence_encoder(embeds, categories, h0, c0, lstm_params, dense_w, dense_b):
    """embeds: (B, T, E) float32; categories: (B, C); h0/c0: (L, B, H)."""
    B, T, E = embeds.shape
    L = len(lstm_params)
    H = h0.shape[-1]
    C = categories.shape[-1]
    tagset = dense_w.shape[0]

    # Pad batch to the f32 sublane tile so every per-timestep slice inside the
    # kernel is tile-aligned.  Padded rows compute garbage that is sliced away
    # below; the extra rows are free (same padded vregs either way).
    Bp = max(8, -(-B // 8) * 8)
    pad = Bp - B

    # Time-major, batch-padded, flattened: per-layer input projection becomes
    # a single (T*Bp, E_in) @ (E_in, 4H) matmul (cheap XLA transpose, once).
    x_tm = jnp.transpose(embeds, (1, 0, 2))                      # (T, B, E)
    x_tm = jnp.pad(x_tm, ((0, 0), (0, pad), (0, 0)))
    x0 = x_tm.reshape(T * Bp, E)
    cats_p = jnp.pad(categories, ((0, pad), (0, 0)))
    h0_p = jnp.pad(h0, ((0, 0), (0, pad), (0, 0)))
    c0_p = jnp.pad(c0, ((0, 0), (0, pad), (0, 0)))

    # Pre-transpose all weights (lane-dense 4H / tag last dim), fuse the two
    # LSTM biases, and fold a x2 into the g-gate columns so the kernel needs
    # only ONE sigmoid per step (tanh(z) = 2*sigmoid(2z) - 1, exact fold).
    g_scale = jnp.concatenate(
        [jnp.ones((1, 2 * H), jnp.float32),
         jnp.full((1, H), 2.0, jnp.float32),
         jnp.ones((1, H), jnp.float32)], axis=1)                 # (1, 4H)
    flat_layer_args = []
    for (w_ih, w_hh, b_ih, b_hh) in lstm_params:
        flat_layer_args += [w_ih.T * g_scale,
                            w_hh.T * g_scale,
                            (b_ih + b_hh).reshape(1, 4 * H) * g_scale]

    # Split dense weight into hidden / category parts (== concat then Linear).
    wd_h_t = dense_w[:, :H].T            # (H, tag)
    wd_c_t = dense_w[:, H:].T            # (C, tag)
    bd = dense_b.reshape(1, tagset)

    inputs = [x0, cats_p, h0_p, c0_p] + flat_layer_args + [wd_h_t, wd_c_t, bd]

    kernel = functools.partial(_lstm_encoder_kernel, L, T, H, Bp)
    vmem = pl.BlockSpec(memory_space=pltpu.MemorySpace.VMEM)
    # Grid-less single invocation (one TensorCore).  For production batches on
    # v7x, add a leading batch-tile grid axis with
    # dimension_semantics=("parallel",) to engage the second TC.
    out_p, h_out_p, c_out_p = pl.pallas_call(
        kernel,
        out_shape=(
            jax.ShapeDtypeStruct((Bp, tagset), jnp.float32),
            jax.ShapeDtypeStruct((L, Bp, H), jnp.float32),
            jax.ShapeDtypeStruct((L, Bp, H), jnp.float32),
        ),
        in_specs=[vmem] * len(inputs),
        out_specs=(vmem, vmem, vmem),
    )(*inputs)
    return out_p[:B], (h_out_p[:, :B], c_out_p[:, :B])


# --------------------------- pure-JAX reference ---------------------------- #

def reference(embeds, categories, h0, c0, lstm_params, dense_w, dense_b):
    B, T, E = embeds.shape
    H = h0.shape[-1]
    seq = embeds
    h_fin, c_fin = [], []
    for l, (w_ih, w_hh, b_ih, b_hh) in enumerate(lstm_params):
        h, c = h0[l], c0[l]
        outs = []
        for t in range(T):
            gates = seq[:, t, :] @ w_ih.T + b_ih + h @ w_hh.T + b_hh
            i = jax.nn.sigmoid(gates[:, :H])
            f = jax.nn.sigmoid(gates[:, H:2 * H])
            g = jnp.tanh(gates[:, 2 * H:3 * H])
            o = jax.nn.sigmoid(gates[:, 3 * H:])
            c = f * c + i * g
            h = o * jnp.tanh(c)
            outs.append(h)
        seq = jnp.stack(outs, axis=1)
        h_fin.append(h)
        c_fin.append(c)
    feat = jnp.concatenate([seq[:, -1, :], categories], axis=1)
    out = jax.nn.sigmoid(feat @ dense_w.T + dense_b)
    return out, (jnp.stack(h_fin), jnp.stack(c_fin))


# ---------------------------------- main ----------------------------------- #

if __name__ == "__main__":
    # Small shapes consistent with the module.
    n_emb = 32
    n_hidden = 32
    n_layers = 2
    vocab_size = 50
    tagset_size = 8
    category_size = 4
    batch = 2
    seq_len = 8

    key = jax.random.PRNGKey(0)
    keys = jax.random.split(key, 32)
    ki = iter(keys)

    def uinit(k, shape, fan):
        bound = 1.0 / jnp.sqrt(fan)
        return jax.random.uniform(k, shape, jnp.float32, -bound, bound)

    # Parameters (deterministic, PyTorch-style shapes).
    embedding_table = uinit(next(ki), (vocab_size, n_emb), 1.0)        # nn.Embedding
    lstm_params = []
    for l in range(n_layers):
        in_dim = n_emb if l == 0 else n_hidden
        w_ih = uinit(next(ki), (4 * n_hidden, in_dim), n_hidden)
        w_hh = uinit(next(ki), (4 * n_hidden, n_hidden), n_hidden)
        b_ih = uinit(next(ki), (4 * n_hidden,), n_hidden)
        b_hh = uinit(next(ki), (4 * n_hidden,), n_hidden)
        lstm_params.append((w_ih, w_hh, b_ih, b_hh))
    dense_w = uinit(next(ki), (tagset_size, n_hidden + category_size),
                    n_hidden + category_size)
    dense_b = uinit(next(ki), (tagset_size,), n_hidden + category_size)

    # Inputs: token ids (pretrained_embedding=False path), categories, hidden.
    token_ids = jax.random.randint(next(ki), (batch, seq_len), 0, vocab_size)
    categories = jax.random.uniform(next(ki), (batch, category_size), jnp.float32)
    h0 = jnp.zeros((n_layers, batch, n_hidden), jnp.float32)   # init_hidden()
    c0 = jnp.zeros((n_layers, batch, n_hidden), jnp.float32)

    # Embedding lookup is a gather -> plain JAX glue.
    embeds = jnp.take(embedding_table, token_ids, axis=0)      # (B, T, E)

    out, (hN, cN) = lstm_sentence_encoder(
        embeds, categories, h0, c0, lstm_params, dense_w, dense_b)
    jax.block_until_ready((out, hN, cN))

    ref_out, (ref_h, ref_c) = reference(
        embeds, categories, h0, c0, lstm_params, dense_w, dense_b)

    assert out.shape == (batch, tagset_size)
    assert hN.shape == (n_layers, batch, n_hidden)
    assert jnp.allclose(out, ref_out, atol=1e-5), "output mismatch"
    assert jnp.allclose(hN, ref_h, atol=1e-5), "hidden mismatch"
    assert jnp.allclose(cN, ref_c, atol=1e-5), "cell mismatch"

    print("KERNEL_OK")
</pallas_src>

<mosaic_0001>
module attributes {stable_mosaic.version = 11 : i64} {
  func.func @_lstm_encoder_kernel(%arg0: memref<64x32xf32, #tpu.memory_space<vmem>>, %arg1: memref<8x4xf32, #tpu.memory_space<vmem>>, %arg2: memref<2x8x32xf32, #tpu.memory_space<vmem>>, %arg3: memref<2x8x32xf32, #tpu.memory_space<vmem>>, %arg4: memref<32x128xf32, #tpu.memory_space<vmem>>, %arg5: memref<32x128xf32, #tpu.memory_space<vmem>>, %arg6: memref<1x128xf32, #tpu.memory_space<vmem>>, %arg7: memref<32x128xf32, #tpu.memory_space<vmem>>, %arg8: memref<32x128xf32, #tpu.memory_space<vmem>>, %arg9: memref<1x128xf32, #tpu.memory_space<vmem>>, %arg10: memref<32x8xf32, #tpu.memory_space<vmem>>, %arg11: memref<4x8xf32, #tpu.memory_space<vmem>>, %arg12: memref<1x8xf32, #tpu.memory_space<vmem>>, %arg13: memref<8x8xf32, #tpu.memory_space<vmem>>, %arg14: memref<2x8x32xf32, #tpu.memory_space<vmem>>, %arg15: memref<2x8x32xf32, #tpu.memory_space<vmem>>) attributes {dimension_semantics = [], scalar_prefetch = 0 : i64, scratch_operands = 0 : i64, tpu.core_type = #tpu.core_type<tc>} {
    %c0 = arith.constant 0 : index
    %c0_0 = arith.constant 0 : index
    %0 = vector.load %arg0[%c0, %c0_0] : memref<64x32xf32, #tpu.memory_space<vmem>>, vector<64x32xf32>
    %c0_1 = arith.constant 0 : index
    %c0_2 = arith.constant 0 : index
    %1 = vector.load %arg4[%c0_1, %c0_2] : memref<32x128xf32, #tpu.memory_space<vmem>>, vector<32x128xf32>
    %c0_3 = arith.constant 0 : index
    %c0_4 = arith.constant 0 : index
    %2 = vector.load %arg5[%c0_3, %c0_4] : memref<32x128xf32, #tpu.memory_space<vmem>>, vector<32x128xf32>
    %c0_5 = arith.constant 0 : index
    %c0_6 = arith.constant 0 : index
    %3 = vector.load %arg6[%c0_5, %c0_6] : memref<1x128xf32, #tpu.memory_space<vmem>>, vector<1x128xf32>
    %cst = arith.constant dense<0.000000e+00> : vector<64x128xf32>
    %4 = tpu.matmul %0, %1, %cst {dimension_numbers = #tpu.dot_dimension_numbers<[1], [0], [0], [1], [0, 0, 1, 1], [], []>} : vector<64x32xf32>, vector<32x128xf32>, vector<64x128xf32> -> vector<64x128xf32>
    %5 = vector.broadcast %3 : vector<1x128xf32> to vector<64x128xf32>
    %6 = arith.addf %4, %5 : vector<64x128xf32>
    %c0_7 = arith.constant 0 : index
    %c0_8 = arith.constant 0 : index
    %c0_9 = arith.constant 0 : index
    %7 = vector.load %arg2[%c0_7, %c0_8, %c0_9] : memref<2x8x32xf32, #tpu.memory_space<vmem>>, vector<1x8x32xf32>
    %8 = vector.shape_cast %7 : vector<1x8x32xf32> to vector<8x32xf32>
    %c0_10 = arith.constant 0 : index
    %c0_11 = arith.constant 0 : index
    %c0_12 = arith.constant 0 : index
    %9 = vector.load %arg3[%c0_10, %c0_11, %c0_12] : memref<2x8x32xf32, #tpu.memory_space<vmem>>, vector<1x8x32xf32>
    %10 = vector.shape_cast %9 : vector<1x8x32xf32> to vector<8x32xf32>
    %11 = vector.extract_strided_slice %6 {offsets = [0, 0], sizes = [8, 128], strides = [1, 1]} : vector<64x128xf32> to vector<8x128xf32>
    %cst_13 = arith.constant dense<0.000000e+00> : vector<8x128xf32>
    %12 = tpu.matmul %8, %2, %cst_13 {dimension_numbers = #tpu.dot_dimension_numbers<[1], [0], [0], [1], [0, 0, 1, 1], [], []>} : vector<8x32xf32>, vector<32x128xf32>, vector<8x128xf32> -> vector<8x128xf32>
    %13 = arith.addf %11, %12 : vector<8x128xf32>
    %14 = arith.negf %13 : vector<8x128xf32>
    %15 = math.exp %14 : vector<8x128xf32>
    %cst_14 = arith.constant 1.000000e+00 : f32
    %16 = vector.broadcast %cst_14 : f32 to vector<8x128xf32>
    %17 = arith.addf %16, %15 : vector<8x128xf32>
    %18 = arith.divf %16, %17 : vector<8x128xf32>
    %19 = vector.extract_strided_slice %18 {offsets = [0, 0], sizes = [8, 32], strides = [1, 1]} : vector<8x128xf32> to vector<8x32xf32>
    %20 = vector.extract_strided_slice %18 {offsets = [0, 32], sizes = [8, 32], strides = [1, 1]} : vector<8x128xf32> to vector<8x32xf32>
    %21 = vector.extract_strided_slice %18 {offsets = [0, 64], sizes = [8, 32], strides = [1, 1]} : vector<8x128xf32> to vector<8x32xf32>
    %cst_15 = arith.constant 2.000000e+00 : f32
    %22 = vector.broadcast %cst_15 : f32 to vector<8x32xf32>
    %23 = arith.mulf %22, %21 : vector<8x32xf32>
    %cst_16 = arith.constant 1.000000e+00 : f32
    %24 = vector.broadcast %cst_16 : f32 to vector<8x32xf32>
    %25 = arith.subf %23, %24 : vector<8x32xf32>
    %26 = vector.extract_strided_slice %18 {offsets = [0, 96], sizes = [8, 32], strides = [1, 1]} : vector<8x128xf32> to vector<8x32xf32>
    %27 = arith.mulf %20, %10 : vector<8x32xf32>
    %28 = arith.mulf %19, %25 : vector<8x32xf32>
    %29 = arith.addf %27, %28 : vector<8x32xf32>
    %30 = math.tanh %29 : vector<8x32xf32>
    %31 = arith.mulf %26, %30 : vector<8x32xf32>
    %32 = vector.extract_strided_slice %6 {offsets = [8, 0], sizes = [8, 128], strides = [1, 1]} : vector<64x128xf32> to vector<8x128xf32>
    %cst_17 = arith.constant dense<0.000000e+00> : vector<8x128xf32>
    %33 = tpu.matmul %31, %2, %cst_17 {dimension_numbers = #tpu.dot_dimension_numbers<[1], [0], [0], [1], [0, 0, 1, 1], [], []>} : vector<8x32xf32>, vector<32x128xf32>, vector<8x128xf32> -> vector<8x128xf32>
    %34 = arith.addf %32, %33 : vector<8x128xf32>
    %35 = arith.negf %34 : vector<8x128xf32>
    %36 = math.exp %35 : vector<8x128xf32>
    %cst_18 = arith.constant 1.000000e+00 : f32
    %37 = vector.broadcast %cst_18 : f32 to vector<8x128xf32>
    %38 = arith.addf %37, %36 : vector<8x128xf32>
    %39 = arith.divf %37, %38 : vector<8x128xf32>
    %40 = vector.extract_strided_slice %39 {offsets = [0, 0], sizes = [8, 32], strides = [1, 1]} : vector<8x128xf32> to vector<8x32xf32>
    %41 = vector.extract_strided_slice %39 {offsets = [0, 32], sizes = [8, 32], strides = [1, 1]} : vector<8x128xf32> to vector<8x32xf32>
    %42 = vector.extract_strided_slice %39 {offsets = [0, 64], sizes = [8, 32], strides = [1, 1]} : vector<8x128xf32> to vector<8x32xf32>
    %cst_19 = arith.constant 2.000000e+00 : f32
    %43 = vector.broadcast %cst_19 : f32 to vector<8x32xf32>
    %44 = arith.mulf %43, %42 : vector<8x32xf32>
    %cst_20 = arith.constant 1.000000e+00 : f32
    %45 = vector.broadcast %cst_20 : f32 to vector<8x32xf32>
    %46 = arith.subf %44, %45 : vector<8x32xf32>
    %47 = vector.extract_strided_slice %39 {offsets = [0, 96], sizes = [8, 32], strides = [1, 1]} : vector<8x128xf32> to vector<8x32xf32>
    %48 = arith.mulf %41, %29 : vector<8x32xf32>
    %49 = arith.mulf %40, %46 : vector<8x32xf32>
    %50 = arith.addf %48, %49 : vector<8x32xf32>
    %51 = math.tanh %50 : vector<8x32xf32>
    %52 = arith.mulf %47, %51 : vector<8x32xf32>
    %53 = vector.extract_strided_slice %6 {offsets = [16, 0], sizes = [8, 128], strides = [1, 1]} : vector<64x128xf32> to vector<8x128xf32>
    %cst_21 = arith.constant dense<0.000000e+00> : vector<8x128xf32>
    %54 = tpu.matmul %52, %2, %cst_21 {dimension_numbers = #tpu.dot_dimension_numbers<[1], [0], [0], [1], [0, 0, 1, 1], [], []>} : vector<8x32xf32>, vector<32x128xf32>, vector<8x128xf32> -> vector<8x128xf32>
    %55 = arith.addf %53, %54 : vector<8x128xf32>
    %56 = arith.negf %55 : vector<8x128xf32>
    %57 = math.exp %56 : vector<8x128xf32>
    %cst_22 = arith.constant 1.000000e+00 : f32
    %58 = vector.broadcast %cst_22 : f32 to vector<8x128xf32>
    %59 = arith.addf %58, %57 : vector<8x128xf32>
    %60 = arith.divf %58, %59 : vector<8x128xf32>
    %61 = vector.extract_strided_slice %60 {offsets = [0, 0], sizes = [8, 32], strides = [1, 1]} : vector<8x128xf32> to vector<8x32xf32>
    %62 = vector.extract_strided_slice %60 {offsets = [0, 32], sizes = [8, 32], strides = [1, 1]} : vector<8x128xf32> to vector<8x32xf32>
    %63 = vector.extract_strided_slice %60 {offsets = [0, 64], sizes = [8, 32], strides = [1, 1]} : vector<8x128xf32> to vector<8x32xf32>
    %cst_23 = arith.constant 2.000000e+00 : f32
    %64 = vector.broadcast %cst_23 : f32 to vector<8x32xf32>
    %65 = arith.mulf %64, %63 : vector<8x32xf32>
    %cst_24 = arith.constant 1.000000e+00 : f32
    %66 = vector.broadcast %cst_24 : f32 to vector<8x32xf32>
    %67 = arith.subf %65, %66 : vector<8x32xf32>
    %68 = vector.extract_strided_slice %60 {offsets = [0, 96], sizes = [8, 32], strides = [1, 1]} : vector<8x128xf32> to vector<8x32xf32>
    %69 = arith.mulf %62, %50 : vector<8x32xf32>
    %70 = arith.mulf %61, %67 : vector<8x32xf32>
    %71 = arith.addf %69, %70 : vector<8x32xf32>
    %72 = math.tanh %71 : vector<8x32xf32>
    %73 = arith.mulf %68, %72 : vector<8x32xf32>
    %74 = vector.extract_strided_slice %6 {offsets = [24, 0], sizes = [8, 128], strides = [1, 1]} : vector<64x128xf32> to vector<8x128xf32>
    %cst_25 = arith.constant dense<0.000000e+00> : vector<8x128xf32>
    %75 = tpu.matmul %73, %2, %cst_25 {dimension_numbers = #tpu.dot_dimension_numbers<[1], [0], [0], [1], [0, 0, 1, 1], [], []>} : vector<8x32xf32>, vector<32x128xf32>, vector<8x128xf32> -> vector<8x128xf32>
    %76 = arith.addf %74, %75 : vector<8x128xf32>
    %77 = arith.negf %76 : vector<8x128xf32>
    %78 = math.exp %77 : vector<8x128xf32>
    %cst_26 = arith.constant 1.000000e+00 : f32
    %79 = vector.broadcast %cst_26 : f32 to vector<8x128xf32>
    %80 = arith.addf %79, %78 : vector<8x128xf32>
    %81 = arith.divf %79, %80 : vector<8x128xf32>
    %82 = vector.extract_strided_slice %81 {offsets = [0, 0], sizes = [8, 32], strides = [1, 1]} : vector<8x128xf32> to vector<8x32xf32>
    %83 = vector.extract_strided_slice %81 {offsets = [0, 32], sizes = [8, 32], strides = [1, 1]} : vector<8x128xf32> to vector<8x32xf32>
    %84 = vector.extract_strided_slice %81 {offsets = [0, 64], sizes = [8, 32], strides = [1, 1]} : vector<8x128xf32> to vector<8x32xf32>
    %cst_27 = arith.constant 2.000000e+00 : f32
    %85 = vector.broadcast %cst_27 : f32 to vector<8x32xf32>
    %86 = arith.mulf %85, %84 : vector<8x32xf32>
    %cst_28 = arith.constant 1.000000e+00 : f32
    %87 = vector.broadcast %cst_28 : f32 to vector<8x32xf32>
    %88 = arith.subf %86, %87 : vector<8x32xf32>
    %89 = vector.extract_strided_slice %81 {offsets = [0, 96], sizes = [8, 32], strides = [1, 1]} : vector<8x128xf32> to vector<8x32xf32>
    %90 = arith.mulf %83, %71 : vector<8x32xf32>
    %91 = arith.mulf %82, %88 : vector<8x32xf32>
    %92 = arith.addf %90, %91 : vector<8x32xf32>
    %93 = math.tanh %92 : vector<8x32xf32>
    %94 = arith.mulf %89, %93 : vector<8x32xf32>
    %95 = vector.extract_strided_slice %6 {offsets = [32, 0], sizes = [8, 128], strides = [1, 1]} : vector<64x128xf32> to vector<8x128xf32>
    %cst_29 = arith.constant dense<0.000000e+00> : vector<8x128xf32>
    %96 = tpu.matmul %94, %2, %cst_29 {dimension_numbers = #tpu.dot_dimension_numbers<[1], [0], [0], [1], [0, 0, 1, 1], [], []>} : vector<8x32xf32>, vector<32x128xf32>, vector<8x128xf32> -> vector<8x128xf32>
    %97 = arith.addf %95, %96 : vector<8x128xf32>
    %98 = arith.negf %97 : vector<8x128xf32>
    %99 = math.exp %98 : vector<8x128xf32>
    %cst_30 = arith.constant 1.000000e+00 : f32
    %100 = vector.broadcast %cst_30 : f32 to vector<8x128xf32>
    %101 = arith.addf %100, %99 : vector<8x128xf32>
    %102 = arith.divf %100, %101 : vector<8x128xf32>
    %103 = vector.extract_strided_slice %102 {offsets = [0, 0], sizes = [8, 32], strides = [1, 1]} : vector<8x128xf32> to vector<8x32xf32>
    %104 = vector.extract_strided_slice %102 {offsets = [0, 32], sizes = [8, 32], strides = [1, 1]} : vector<8x128xf32> to vector<8x32xf32>
    %105 = vector.extract_strided_slice %102 {offsets = [0, 64], sizes = [8, 32], strides = [1, 1]} : vector<8x128xf32> to vector<8x32xf32>
    %cst_31 = arith.constant 2.000000e+00 : f32
    %106 = vector.broadcast %cst_31 : f32 to vector<8x32xf32>
    %107 = arith.mulf %106, %105 : vector<8x32xf32>
    %cst_32 = arith.constant 1.000000e+00 : f32
    %108 = vector.broadcast %cst_32 : f32 to vector<8x32xf32>
    %109 = arith.subf %107, %108 : vector<8x32xf32>
    %110 = vector.extract_strided_slice %102 {offsets = [0, 96], sizes = [8, 32], strides = [1, 1]} : vector<8x128xf32> to vector<8x32xf32>
    %111 = arith.mulf %104, %92 : vector<8x32xf32>
    %112 = arith.mulf %103, %109 : vector<8x32xf32>
    %113 = arith.addf %111, %112 : vector<8x32xf32>
    %114 = math.tanh %113 : vector<8x32xf32>
    %115 = arith.mulf %110, %114 : vector<8x32xf32>
    %116 = vector.extract_strided_slice %6 {offsets = [40, 0], sizes = [8, 128], strides = [1, 1]} : vector<64x128xf32> to vector<8x128xf32>
    %cst_33 = arith.constant dense<0.000000e+00> : vector<8x128xf32>
    %117 = tpu.matmul %115, %2, %cst_33 {dimension_numbers = #tpu.dot_dimension_numbers<[1], [0], [0], [1], [0, 0, 1, 1], [], []>} : vector<8x32xf32>, vector<32x128xf32>, vector<8x128xf32> -> vector<8x128xf32>
    %118 = arith.addf %116, %117 : vector<8x128xf32>
    %119 = arith.negf %118 : vector<8x128xf32>
    %120 = math.exp %119 : vector<8x128xf32>
    %cst_34 = arith.constant 1.000000e+00 : f32
    %121 = vector.broadcast %cst_34 : f32 to vector<8x128xf32>
    %122 = arith.addf %121, %120 : vector<8x128xf32>
    %123 = arith.divf %121, %122 : vector<8x128xf32>
    %124 = vector.extract_strided_slice %123 {offsets = [0, 0], sizes = [8, 32], strides = [1, 1]} : vector<8x128xf32> to vector<8x32xf32>
    %125 = vector.extract_strided_slice %123 {offsets = [0, 32], sizes = [8, 32], strides = [1, 1]} : vector<8x128xf32> to vector<8x32xf32>
    %126 = vector.extract_strided_slice %123 {offsets = [0, 64], sizes = [8, 32], strides = [1, 1]} : vector<8x128xf32> to vector<8x32xf32>
    %cst_35 = arith.constant 2.000000e+00 : f32
    %127 = vector.broadcast %cst_35 : f32 to vector<8x32xf32>
    %128 = arith.mulf %127, %126 : vector<8x32xf32>
    %cst_36 = arith.constant 1.000000e+00 : f32
    %129 = vector.broadcast %cst_36 : f32 to vector<8x32xf32>
    %130 = arith.subf %128, %129 : vector<8x32xf32>
    %131 = vector.extract_strided_slice %123 {offsets = [0, 96], sizes = [8, 32], strides = [1, 1]} : vector<8x128xf32> to vector<8x32xf32>
    %132 = arith.mulf %125, %113 : vector<8x32xf32>
    %133 = arith.mulf %124, %130 : vector<8x32xf32>
    %134 = arith.addf %132, %133 : vector<8x32xf32>
    %135 = math.tanh %134 : vector<8x32xf32>
    %136 = arith.mulf %131, %135 : vector<8x32xf32>
    %137 = vector.extract_strided_slice %6 {offsets = [48, 0], sizes = [8, 128], strides = [1, 1]} : vector<64x128xf32> to vector<8x128xf32>
    %cst_37 = arith.constant dense<0.000000e+00> : vector<8x128xf32>
    %138 = tpu.matmul %136, %2, %cst_37 {dimension_numbers = #tpu.dot_dimension_numbers<[1], [0], [0], [1], [0, 0, 1, 1], [], []>} : vector<8x32xf32>, vector<32x128xf32>, vector<8x128xf32> -> vector<8x128xf32>
    %139 = arith.addf %137, %138 : vector<8x128xf32>
    %140 = arith.negf %139 : vector<8x128xf32>
    %141 = math.exp %140 : vector<8x128xf32>
    %cst_38 = arith.constant 1.000000e+00 : f32
    %142 = vector.broadcast %cst_38 : f32 to vector<8x128xf32>
    %143 = arith.addf %142, %141 : vector<8x128xf32>
    %144 = arith.divf %142, %143 : vector<8x128xf32>
    %145 = vector.extract_strided_slice %144 {offsets = [0, 0], sizes = [8, 32], strides = [1, 1]} : vector<8x128xf32> to vector<8x32xf32>
    %146 = vector.extract_strided_slice %144 {offsets = [0, 32], sizes = [8, 32], strides = [1, 1]} : vector<8x128xf32> to vector<8x32xf32>
    %147 = vector.extract_strided_slice %144 {offsets = [0, 64], sizes = [8, 32], strides = [1, 1]} : vector<8x128xf32> to vector<8x32xf32>
    %cst_39 = arith.constant 2.000000e+00 : f32
    %148 = vector.broadcast %cst_39 : f32 to vector<8x32xf32>
    %149 = arith.mulf %148, %147 : vector<8x32xf32>
    %cst_40 = arith.constant 1.000000e+00 : f32
    %150 = vector.broadcast %cst_40 : f32 to vector<8x32xf32>
    %151 = arith.subf %149, %150 : vector<8x32xf32>
    %152 = vector.extract_strided_slice %144 {offsets = [0, 96], sizes = [8, 32], strides = [1, 1]} : vector<8x128xf32> to vector<8x32xf32>
    %153 = arith.mulf %146, %134 : vector<8x32xf32>
    %154 = arith.mulf %145, %151 : vector<8x32xf32>
    %155 = arith.addf %153, %154 : vector<8x32xf32>
    %156 = math.tanh %155 : vector<8x32xf32>
    %157 = arith.mulf %152, %156 : vector<8x32xf32>
    %158 = vector.extract_strided_slice %6 {offsets = [56, 0], sizes = [8, 128], strides = [1, 1]} : vector<64x128xf32> to vector<8x128xf32>
    %cst_41 = arith.constant dense<0.000000e+00> : vector<8x128xf32>
    %159 = tpu.matmul %157, %2, %cst_41 {dimension_numbers = #tpu.dot_dimension_numbers<[1], [0], [0], [1], [0, 0, 1, 1], [], []>} : vector<8x32xf32>, vector<32x128xf32>, vector<8x128xf32> -> vector<8x128xf32>
    %160 = arith.addf %158, %159 : vector<8x128xf32>
    %161 = arith.negf %160 : vector<8x128xf32>
    %162 = math.exp %161 : vector<8x128xf32>
    %cst_42 = arith.constant 1.000000e+00 : f32
    %163 = vector.broadcast %cst_42 : f32 to vector<8x128xf32>
    %164 = arith.addf %163, %162 : vector<8x128xf32>
    %165 = arith.divf %163, %164 : vector<8x128xf32>
    %166 = vector.extract_strided_slice %165 {offsets = [0, 0], sizes = [8, 32], strides = [1, 1]} : vector<8x128xf32> to vector<8x32xf32>
    %167 = vector.extract_strided_slice %165 {offsets = [0, 32], sizes = [8, 32], strides = [1, 1]} : vector<8x128xf32> to vector<8x32xf32>
    %168 = vector.extract_strided_slice %165 {offsets = [0, 64], sizes = [8, 32], strides = [1, 1]} : vector<8x128xf32> to vector<8x32xf32>
    %cst_43 = arith.constant 2.000000e+00 : f32
    %169 = vector.broadcast %cst_43 : f32 to vector<8x32xf32>
    %170 = arith.mulf %169, %168 : vector<8x32xf32>
    %cst_44 = arith.constant 1.000000e+00 : f32
    %171 = vector.broadcast %cst_44 : f32 to vector<8x32xf32>
    %172 = arith.subf %170, %171 : vector<8x32xf32>
    %173 = vector.extract_strided_slice %165 {offsets = [0, 96], sizes = [8, 32], strides = [1, 1]} : vector<8x128xf32> to vector<8x32xf32>
    %174 = arith.mulf %167, %155 : vector<8x32xf32>
    %175 = arith.mulf %166, %172 : vector<8x32xf32>
    %176 = arith.addf %174, %175 : vector<8x32xf32>
    %177 = math.tanh %176 : vector<8x32xf32>
    %178 = arith.mulf %173, %177 : vector<8x32xf32>
    %179 = tpu.concatenate %31, %52, %73, %94, %115, %136, %157, %178 in 0 : vector<8x32xf32>, vector<8x32xf32>, vector<8x32xf32>, vector<8x32xf32>, vector<8x32xf32>, vector<8x32xf32>, vector<8x32xf32>, vector<8x32xf32> -> vector<64x32xf32>
    %c0_45 = arith.constant 0 : index
    %c0_46 = arith.constant 0 : index
    %c0_47 = arith.constant 0 : index
    %180 = vector.load %arg14[%c0_45, %c0_46, %c0_47] : memref<2x8x32xf32, #tpu.memory_space<vmem>>, vector<1x8x32xf32>
    %181 = vector.shape_cast %180 : vector<1x8x32xf32> to vector<8x32xf32>
    %182 = vector.shape_cast %178 : vector<8x32xf32> to vector<1x8x32xf32>
    tpu.vector_store %arg14[%c0_45, %c0_46, %c0_47], %182 {strides = array<i32>} : memref<2x8x32xf32, #tpu.memory_space<vmem>>, vector<1x8x32xf32>,
    %c0_48 = arith.constant 0 : index
    %c0_49 = arith.constant 0 : index
    %c0_50 = arith.constant 0 : index
    %183 = vector.load %arg15[%c0_48, %c0_49, %c0_50] : memref<2x8x32xf32, #tpu.memory_space<vmem>>, vector<1x8x32xf32>
    %184 = vector.shape_cast %183 : vector<1x8x32xf32> to vector<8x32xf32>
    %185 = vector.shape_cast %176 : vector<8x32xf32> to vector<1x8x32xf32>
    tpu.vector_store %arg15[%c0_48, %c0_49, %c0_50], %185 {strides = array<i32>} : memref<2x8x32xf32, #tpu.memory_space<vmem>>, vector<1x8x32xf32>,
    %c0_51 = arith.constant 0 : index
    %c0_52 = arith.constant 0 : index
    %186 = vector.load %arg7[%c0_51, %c0_52] : memref<32x128xf32, #tpu.memory_space<vmem>>, vector<32x128xf32>
    %c0_53 = arith.constant 0 : index
    %c0_54 = arith.constant 0 : index
    %187 = vector.load %arg8[%c0_53, %c0_54] : memref<32x128xf32, #tpu.memory_space<vmem>>, vector<32x128xf32>
    %c0_55 = arith.constant 0 : index
    %c0_56 = arith.constant 0 : index
    %188 = vector.load %arg9[%c0_55, %c0_56] : memref<1x128xf32, #tpu.memory_space<vmem>>, vector<1x128xf32>
    %cst_57 = arith.constant dense<0.000000e+00> : vector<64x128xf32>
    %189 = tpu.matmul %179, %186, %cst_57 {dimension_numbers = #tpu.dot_dimension_numbers<[1], [0], [0], [1], [0, 0, 1, 1], [], []>} : vector<64x32xf32>, vector<32x128xf32>, vector<64x128xf32> -> vector<64x128xf32>
    %190 = vector.broadcast %188 : vector<1x128xf32> to vector<64x128xf32>
    %191 = arith.addf %189, %190 : vector<64x128xf32>
    %c1 = arith.constant 1 : index
    %c0_58 = arith.constant 0 : index
    %c0_59 = arith.constant 0 : index
    %192 = vector.load %arg2[%c1, %c0_58, %c0_59] : memref<2x8x32xf32, #tpu.memory_space<vmem>>, vector<1x8x32xf32>
    %193 = vector.shape_cast %192 : vector<1x8x32xf32> to vector<8x32xf32>
    %c1_60 = arith.constant 1 : index
    %c0_61 = arith.constant 0 : index
    %c0_62 = arith.constant 0 : index
    %194 = vector.load %arg3[%c1_60, %c0_61, %c0_62] : memref<2x8x32xf32, #tpu.memory_space<vmem>>, vector<1x8x32xf32>
    %195 = vector.shape_cast %194 : vector<1x8x32xf32> to vector<8x32xf32>
    %196 = vector.extract_strided_slice %191 {offsets = [0, 0], sizes = [8, 128], strides = [1, 1]} : vector<64x128xf32> to vector<8x128xf32>
    %cst_63 = arith.constant dense<0.000000e+00> : vector<8x128xf32>
    %197 = tpu.matmul %193, %187, %cst_63 {dimension_numbers = #tpu.dot_dimension_numbers<[1], [0], [0], [1], [0, 0, 1, 1], [], []>} : vector<8x32xf32>, vector<32x128xf32>, vector<8x128xf32> -> vector<8x128xf32>
    %198 = arith.addf %196, %197 : vector<8x128xf32>
    %199 = arith.negf %198 : vector<8x128xf32>
    %200 = math.exp %199 : vector<8x128xf32>
    %cst_64 = arith.constant 1.000000e+00 : f32
    %201 = vector.broadcast %cst_64 : f32 to vector<8x128xf32>
    %202 = arith.addf %201, %200 : vector<8x128xf32>
    %203 = arith.divf %201, %202 : vector<8x128xf32>
    %204 = vector.extract_strided_slice %203 {offsets = [0, 0], sizes = [8, 32], strides = [1, 1]} : vector<8x128xf32> to vector<8x32xf32>
    %205 = vector.extract_strided_slice %203 {offsets = [0, 32], sizes = [8, 32], strides = [1, 1]} : vector<8x128xf32> to vector<8x32xf32>
    %206 = vector.extract_strided_slice %203 {offsets = [0, 64], sizes = [8, 32], strides = [1, 1]} : vector<8x128xf32> to vector<8x32xf32>
    %cst_65 = arith.constant 2.000000e+00 : f32
    %207 = vector.broadcast %cst_65 : f32 to vector<8x32xf32>
    %208 = arith.mulf %207, %206 : vector<8x32xf32>
    %cst_66 = arith.constant 1.000000e+00 : f32
    %209 = vector.broadcast %cst_66 : f32 to vector<8x32xf32>
    %210 = arith.subf %208, %209 : vector<8x32xf32>
    %211 = vector.extract_strided_slice %203 {offsets = [0, 96], sizes = [8, 32], strides = [1, 1]} : vector<8x128xf32> to vector<8x32xf32>
    %212 = arith.mulf %205, %195 : vector<8x32xf32>
    %213 = arith.mulf %204, %210 : vector<8x32xf32>
    %214 = arith.addf %212, %213 : vector<8x32xf32>
    %215 = math.tanh %214 : vector<8x32xf32>
    %216 = arith.mulf %211, %215 : vector<8x32xf32>
    %217 = vector.extract_strided_slice %191 {offsets = [8, 0], sizes = [8, 128], strides = [1, 1]} : vector<64x128xf32> to vector<8x128xf32>
    %cst_67 = arith.constant dense<0.000000e+00> : vector<8x128xf32>
    %218 = tpu.matmul %216, %187, %cst_67 {dimension_numbers = #tpu.dot_dimension_numbers<[1], [0], [0], [1], [0, 0, 1, 1], [], []>} : vector<8x32xf32>, vector<32x128xf32>, vector<8x128xf32> -> vector<8x128xf32>
    %219 = arith.addf %217, %218 : vector<8x128xf32>
    %220 = arith.negf %219 : vector<8x128xf32>
    %221 = math.exp %220 : vector<8x128xf32>
    %cst_68 = arith.constant 1.000000e+00 : f32
    %222 = vector.broadcast %cst_68 : f32 to vector<8x128xf32>
    %223 = arith.addf %222, %221 : vector<8x128xf32>
    %224 = arith.divf %222, %223 : vector<8x128xf32>
    %225 = vector.extract_strided_slice %224 {offsets = [0, 0], sizes = [8, 32], strides = [1, 1]} : vector<8x128xf32> to vector<8x32xf32>
    %226 = vector.extract_strided_slice %224 {offsets = [0, 32], sizes = [8, 32], strides = [1, 1]} : vector<8x128xf32> to vector<8x32xf32>
    %227 = vector.extract_strided_slice %224 {offsets = [0, 64], sizes = [8, 32], strides = [1, 1]} : vector<8x128xf32> to vector<8x32xf32>
    %cst_69 = arith.constant 2.000000e+00 : f32
    %228 = vector.broadcast %cst_69 : f32 to vector<8x32xf32>
    %229 = arith.mulf %228, %227 : vector<8x32xf32>
    %cst_70 = arith.constant 1.000000e+00 : f32
    %230 = vector.broadcast %cst_70 : f32 to vector<8x32xf32>
    %231 = arith.subf %229, %230 : vector<8x32xf32>
    %232 = vector.extract_strided_slice %224 {offsets = [0, 96], sizes = [8, 32], strides = [1, 1]} : vector<8x128xf32> to vector<8x32xf32>
    %233 = arith.mulf %226, %214 : vector<8x32xf32>
    %234 = arith.mulf %225, %231 : vector<8x32xf32>
    %235 = arith.addf %233, %234 : vector<8x32xf32>
    %236 = math.tanh %235 : vector<8x32xf32>
    %237 = arith.mulf %232, %236 : vector<8x32xf32>
    %238 = vector.extract_strided_slice %191 {offsets = [16, 0], sizes = [8, 128], strides = [1, 1]} : vector<64x128xf32> to vector<8x128xf32>
    %cst_71 = arith.constant dense<0.000000e+00> : vector<8x128xf32>
    %239 = tpu.matmul %237, %187, %cst_71 {dimension_numbers = #tpu.dot_dimension_numbers<[1], [0], [0], [1], [0, 0, 1, 1], [], []>} : vector<8x32xf32>, vector<32x128xf32>, vector<8x128xf32> -> vector<8x128xf32>
    %240 = arith.addf %238, %239 : vector<8x128xf32>
    %241 = arith.negf %240 : vector<8x128xf32>
    %242 = math.exp %241 : vector<8x128xf32>
    %cst_72 = arith.constant 1.000000e+00 : f32
    %243 = vector.broadcast %cst_72 : f32 to vector<8x128xf32>
    %244 = arith.addf %243, %242 : vector<8x128xf32>
    %245 = arith.divf %243, %244 : vector<8x128xf32>
    %246 = vector.extract_strided_slice %245 {offsets = [0, 0], sizes = [8, 32], strides = [1, 1]} : vector<8x128xf32> to vector<8x32xf32>
    %247 = vector.extract_strided_slice %245 {offsets = [0, 32], sizes = [8, 32], strides = [1, 1]} : vector<8x128xf32> to vector<8x32xf32>
    %248 = vector.extract_strided_slice %245 {offsets = [0, 64], sizes = [8, 32], strides = [1, 1]} : vector<8x128xf32> to vector<8x32xf32>
    %cst_73 = arith.constant 2.000000e+00 : f32
    %249 = vector.broadcast %cst_73 : f32 to vector<8x32xf32>
    %250 = arith.mulf %249, %248 : vector<8x32xf32>
    %cst_74 = arith.constant 1.000000e+00 : f32
    %251 = vector.broadcast %cst_74 : f32 to vector<8x32xf32>
    %252 = arith.subf %250, %251 : vector<8x32xf32>
    %253 = vector.extract_strided_slice %245 {offsets = [0, 96], sizes = [8, 32], strides = [1, 1]} : vector<8x128xf32> to vector<8x32xf32>
    %254 = arith.mulf %247, %235 : vector<8x32xf32>
    %255 = arith.mulf %246, %252 : vector<8x32xf32>
    %256 = arith.addf %254, %255 : vector<8x32xf32>
    %257 = math.tanh %256 : vector<8x32xf32>
    %258 = arith.mulf %253, %257 : vector<8x32xf32>
    %259 = vector.extract_strided_slice %191 {offsets = [24, 0], sizes = [8, 128], strides = [1, 1]} : vector<64x128xf32> to vector<8x128xf32>
    %cst_75 = arith.constant dense<0.000000e+00> : vector<8x128xf32>
    %260 = tpu.matmul %258, %187, %cst_75 {dimension_numbers = #tpu.dot_dimension_numbers<[1], [0], [0], [1], [0, 0, 1, 1], [], []>} : vector<8x32xf32>, vector<32x128xf32>, vector<8x128xf32> -> vector<8x128xf32>
    %261 = arith.addf %259, %260 : vector<8x128xf32>
    %262 = arith.negf %261 : vector<8x128xf32>
    %263 = math.exp %262 : vector<8x128xf32>
    %cst_76 = arith.constant 1.000000e+00 : f32
    %264 = vector.broadcast %cst_76 : f32 to vector<8x128xf32>
    %265 = arith.addf %264, %263 : vector<8x128xf32>
    %266 = arith.divf %264, %265 : vector<8x128xf32>
    %267 = vector.extract_strided_slice %266 {offsets = [0, 0], sizes = [8, 32], strides = [1, 1]} : vector<8x128xf32> to vector<8x32xf32>
    %268 = vector.extract_strided_slice %266 {offsets = [0, 32], sizes = [8, 32], strides = [1, 1]} : vector<8x128xf32> to vector<8x32xf32>
    %269 = vector.extract_strided_slice %266 {offsets = [0, 64], sizes = [8, 32], strides = [1, 1]} : vector<8x128xf32> to vector<8x32xf32>
    %cst_77 = arith.constant 2.000000e+00 : f32
    %270 = vector.broadcast %cst_77 : f32 to vector<8x32xf32>
    %271 = arith.mulf %270, %269 : vector<8x32xf32>
    %cst_78 = arith.constant 1.000000e+00 : f32
    %272 = vector.broadcast %cst_78 : f32 to vector<8x32xf32>
    %273 = arith.subf %271, %272 : vector<8x32xf32>
    %274 = vector.extract_strided_slice %266 {offsets = [0, 96], sizes = [8, 32], strides = [1, 1]} : vector<8x128xf32> to vector<8x32xf32>
    %275 = arith.mulf %268, %256 : vector<8x32xf32>
    %276 = arith.mulf %267, %273 : vector<8x32xf32>
    %277 = arith.addf %275, %276 : vector<8x32xf32>
    %278 = math.tanh %277 : vector<8x32xf32>
    %279 = arith.mulf %274, %278 : vector<8x32xf32>
    %280 = vector.extract_strided_slice %191 {offsets = [32, 0], sizes = [8, 128], strides = [1, 1]} : vector<64x128xf32> to vector<8x128xf32>
    %cst_79 = arith.constant dense<0.000000e+00> : vector<8x128xf32>
    %281 = tpu.matmul %279, %187, %cst_79 {dimension_numbers = #tpu.dot_dimension_numbers<[1], [0], [0], [1], [0, 0, 1, 1], [], []>} : vector<8x32xf32>, vector<32x128xf32>, vector<8x128xf32> -> vector<8x128xf32>
    %282 = arith.addf %280, %281 : vector<8x128xf32>
    %283 = arith.negf %282 : vector<8x128xf32>
    %284 = math.exp %283 : vector<8x128xf32>
    %cst_80 = arith.constant 1.000000e+00 : f32
    %285 = vector.broadcast %cst_80 : f32 to vector<8x128xf32>
    %286 = arith.addf %285, %284 : vector<8x128xf32>
    %287 = arith.divf %285, %286 : vector<8x128xf32>
    %288 = vector.extract_strided_slice %287 {offsets = [0, 0], sizes = [8, 32], strides = [1, 1]} : vector<8x128xf32> to vector<8x32xf32>
    %289 = vector.extract_strided_slice %287 {offsets = [0, 32], sizes = [8, 32], strides = [1, 1]} : vector<8x128xf32> to vector<8x32xf32>
    %290 = vector.extract_strided_slice %287 {offsets = [0, 64], sizes = [8, 32], strides = [1, 1]} : vector<8x128xf32> to vector<8x32xf32>
    %cst_81 = arith.constant 2.000000e+00 : f32
    %291 = vector.broadcast %cst_81 : f32 to vector<8x32xf32>
    %292 = arith.mulf %291, %290 : vector<8x32xf32>
    %cst_82 = arith.constant 1.000000e+00 : f32
    %293 = vector.broadcast %cst_82 : f32 to vector<8x32xf32>
    %294 = arith.subf %292, %293 : vector<8x32xf32>
    %295 = vector.extract_strided_slice %287 {offsets = [0, 96], sizes = [8, 32], strides = [1, 1]} : vector<8x128xf32> to vector<8x32xf32>
    %296 = arith.mulf %289, %277 : vector<8x32xf32>
    %297 = arith.mulf %288, %294 : vector<8x32xf32>
    %298 = arith.addf %296, %297 : vector<8x32xf32>
    %299 = math.tanh %298 : vector<8x32xf32>
    %300 = arith.mulf %295, %299 : vector<8x32xf32>
    %301 = vector.extract_strided_slice %191 {offsets = [40, 0], sizes = [8, 128], strides = [1, 1]} : vector<64x128xf32> to vector<8x128xf32>
    %cst_83 = arith.constant dense<0.000000e+00> : vector<8x128xf32>
    %302 = tpu.matmul %300, %187, %cst_83 {dimension_numbers = #tpu.dot_dimension_numbers<[1], [0], [0], [1], [0, 0, 1, 1], [], []>} : vector<8x32xf32>, vector<32x128xf32>, vector<8x128xf32> -> vector<8x128xf32>
    %303 = arith.addf %301, %302 : vector<8x128xf32>
    %304 = arith.negf %303 : vector<8x128xf32>
    %305 = math.exp %304 : vector<8x128xf32>
    %cst_84 = arith.constant 1.000000e+00 : f32
    %306 = vector.broadcast %cst_84 : f32 to vector<8x128xf32>
    %307 = arith.addf %306, %305 : vector<8x128xf32>
    %308 = arith.divf %306, %307 : vector<8x128xf32>
    %309 = vector.extract_strided_slice %308 {offsets = [0, 0], sizes = [8, 32], strides = [1, 1]} : vector<8x128xf32> to vector<8x32xf32>
    %310 = vector.extract_strided_slice %308 {offsets = [0, 32], sizes = [8, 32], strides = [1, 1]} : vector<8x128xf32> to vector<8x32xf32>
    %311 = vector.extract_strided_slice %308 {offsets = [0, 64], sizes = [8, 32], strides = [1, 1]} : vector<8x128xf32> to vector<8x32xf32>
    %cst_85 = arith.constant 2.000000e+00 : f32
    %312 = vector.broadcast %cst_85 : f32 to vector<8x32xf32>
    %313 = arith.mulf %312, %311 : vector<8x32xf32>
    %cst_86 = arith.constant 1.000000e+00 : f32
    %314 = vector.broadcast %cst_86 : f32 to vector<8x32xf32>
    %315 = arith.subf %313, %314 : vector<8x32xf32>
    %316 = vector.extract_strided_slice %308 {offsets = [0, 96], sizes = [8, 32], strides = [1, 1]} : vector<8x128xf32> to vector<8x32xf32>
    %317 = arith.mulf %310, %298 : vector<8x32xf32>
    %318 = arith.mulf %309, %315 : vector<8x32xf32>
    %319 = arith.addf %317, %318 : vector<8x32xf32>
    %320 = math.tanh %319 : vector<8x32xf32>
    %321 = arith.mulf %316, %320 : vector<8x32xf32>
    %322 = vector.extract_strided_slice %191 {offsets = [48, 0], sizes = [8, 128], strides = [1, 1]} : vector<64x128xf32> to vector<8x128xf32>
    %cst_87 = arith.constant dense<0.000000e+00> : vector<8x128xf32>
    %323 = tpu.matmul %321, %187, %cst_87 {dimension_numbers = #tpu.dot_dimension_numbers<[1], [0], [0], [1], [0, 0, 1, 1], [], []>} : vector<8x32xf32>, vector<32x128xf32>, vector<8x128xf32> -> vector<8x128xf32>
    %324 = arith.addf %322, %323 : vector<8x128xf32>
    %325 = arith.negf %324 : vector<8x128xf32>
    %326 = math.exp %325 : vector<8x128xf32>
    %cst_88 = arith.constant 1.000000e+00 : f32
    %327 = vector.broadcast %cst_88 : f32 to vector<8x128xf32>
    %328 = arith.addf %327, %326 : vector<8x128xf32>
    %329 = arith.divf %327, %328 : vector<8x128xf32>
    %330 = vector.extract_strided_slice %329 {offsets = [0, 0], sizes = [8, 32], strides = [1, 1]} : vector<8x128xf32> to vector<8x32xf32>
    %331 = vector.extract_strided_slice %329 {offsets = [0, 32], sizes = [8, 32], strides = [1, 1]} : vector<8x128xf32> to vector<8x32xf32>
    %332 = vector.extract_strided_slice %329 {offsets = [0, 64], sizes = [8, 32], strides = [1, 1]} : vector<8x128xf32> to vector<8x32xf32>
    %cst_89 = arith.constant 2.000000e+00 : f32
    %333 = vector.broadcast %cst_89 : f32 to vector<8x32xf32>
    %334 = arith.mulf %333, %332 : vector<8x32xf32>
    %cst_90 = arith.constant 1.000000e+00 : f32
    %335 = vector.broadcast %cst_90 : f32 to vector<8x32xf32>
    %336 = arith.subf %334, %335 : vector<8x32xf32>
    %337 = vector.extract_strided_slice %329 {offsets = [0, 96], sizes = [8, 32], strides = [1, 1]} : vector<8x128xf32> to vector<8x32xf32>
    %338 = arith.mulf %331, %319 : vector<8x32xf32>
    %339 = arith.mulf %330, %336 : vector<8x32xf32>
    %340 = arith.addf %338, %339 : vector<8x32xf32>
    %341 = math.tanh %340 : vector<8x32xf32>
    %342 = arith.mulf %337, %341 : vector<8x32xf32>
    %343 = vector.extract_strided_slice %191 {offsets = [56, 0], sizes = [8, 128], strides = [1, 1]} : vector<64x128xf32> to vector<8x128xf32>
    %cst_91 = arith.constant dense<0.000000e+00> : vector<8x128xf32>
    %344 = tpu.matmul %342, %187, %cst_91 {dimension_numbers = #tpu.dot_dimension_numbers<[1], [0], [0], [1], [0, 0, 1, 1], [], []>} : vector<8x32xf32>, vector<32x128xf32>, vector<8x128xf32> -> vector<8x128xf32>
    %345 = arith.addf %343, %344 : vector<8x128xf32>
    %346 = arith.negf %345 : vector<8x128xf32>
    %347 = math.exp %346 : vector<8x128xf32>
    %cst_92 = arith.constant 1.000000e+00 : f32
    %348 = vector.broadcast %cst_92 : f32 to vector<8x128xf32>
    %349 = arith.addf %348, %347 : vector<8x128xf32>
    %350 = arith.divf %348, %349 : vector<8x128xf32>
    %351 = vector.extract_strided_slice %350 {offsets = [0, 0], sizes = [8, 32], strides = [1, 1]} : vector<8x128xf32> to vector<8x32xf32>
    %352 = vector.extract_strided_slice %350 {offsets = [0, 32], sizes = [8, 32], strides = [1, 1]} : vector<8x128xf32> to vector<8x32xf32>
    %353 = vector.extract_strided_slice %350 {offsets = [0, 64], sizes = [8, 32], strides = [1, 1]} : vector<8x128xf32> to vector<8x32xf32>
    %cst_93 = arith.constant 2.000000e+00 : f32
    %354 = vector.broadcast %cst_93 : f32 to vector<8x32xf32>
    %355 = arith.mulf %354, %353 : vector<8x32xf32>
    %cst_94 = arith.constant 1.000000e+00 : f32
    %356 = vector.broadcast %cst_94 : f32 to vector<8x32xf32>
    %357 = arith.subf %355, %356 : vector<8x32xf32>
    %358 = vector.extract_strided_slice %350 {offsets = [0, 96], sizes = [8, 32], strides = [1, 1]} : vector<8x128xf32> to vector<8x32xf32>
    %359 = arith.mulf %352, %340 : vector<8x32xf32>
    %360 = arith.mulf %351, %357 : vector<8x32xf32>
    %361 = arith.addf %359, %360 : vector<8x32xf32>
    %362 = math.tanh %361 : vector<8x32xf32>
    %363 = arith.mulf %358, %362 : vector<8x32xf32>
    %c1_95 = arith.constant 1 : index
    %c0_96 = arith.constant 0 : index
    %c0_97 = arith.constant 0 : index
    %364 = vector.load %arg14[%c1_95, %c0_96, %c0_97] : memref<2x8x32xf32, #tpu.memory_space<vmem>>, vector<1x8x32xf32>
    %365 = vector.shape_cast %364 : vector<1x8x32xf32> to vector<8x32xf32>
    %366 = vector.shape_cast %363 : vector<8x32xf32> to vector<1x8x32xf32>
    tpu.vector_store %arg14[%c1_95, %c0_96, %c0_97], %366 {strides = array<i32>} : memref<2x8x32xf32, #tpu.memory_space<vmem>>, vector<1x8x32xf32>,
    %c1_98 = arith.constant 1 : index
    %c0_99 = arith.constant 0 : index
    %c0_100 = arith.constant 0 : index
    %367 = vector.load %arg15[%c1_98, %c0_99, %c0_100] : memref<2x8x32xf32, #tpu.memory_space<vmem>>, vector<1x8x32xf32>
    %368 = vector.shape_cast %367 : vector<1x8x32xf32> to vector<8x32xf32>
    %369 = vector.shape_cast %361 : vector<8x32xf32> to vector<1x8x32xf32>
    tpu.vector_store %arg15[%c1_98, %c0_99, %c0_100], %369 {strides = array<i32>} : memref<2x8x32xf32, #tpu.memory_space<vmem>>, vector<1x8x32xf32>,
    %c0_101 = arith.constant 0 : index
    %c0_102 = arith.constant 0 : index
    %370 = vector.load %arg1[%c0_101, %c0_102] : memref<8x4xf32, #tpu.memory_space<vmem>>, vector<8x4xf32>
    %c0_103 = arith.constant 0 : index
    %c0_104 = arith.constant 0 : index
    %371 = vector.load %arg10[%c0_103, %c0_104] : memref<32x8xf32, #tpu.memory_space<vmem>>, vector<32x8xf32>
    %cst_105 = arith.constant dense<0.000000e+00> : vector<8x8xf32>
    %372 = tpu.matmul %363, %371, %cst_105 {dimension_numbers = #tpu.dot_dimension_numbers<[1], [0], [0], [1], [0, 0, 1, 1], [], []>} : vector<8x32xf32>, vector<32x8xf32>, vector<8x8xf32> -> vector<8x8xf32>
    %c0_106 = arith.constant 0 : index
    %c0_107 = arith.constant 0 : index
    %373 = vector.load %arg11[%c0_106, %c0_107] : memref<4x8xf32, #tpu.memory_space<vmem>>, vector<4x8xf32>
    %cst_108 = arith.constant dense<0.000000e+00> : vector<8x8xf32>
    %374 = tpu.matmul %370, %373, %cst_108 {dimension_numbers = #tpu.dot_dimension_numbers<[1], [0], [0], [1], [0, 0, 1, 1], [], []>} : vector<8x4xf32>, vector<4x8xf32>, vector<8x8xf32> -> vector<8x8xf32>
    %375 = arith.addf %372, %374 : vector<8x8xf32>
    %c0_109 = arith.constant 0 : index
    %c0_110 = arith.constant 0 : index
    %376 = vector.load %arg12[%c0_109, %c0_110] : memref<1x8xf32, #tpu.memory_space<vmem>>, vector<1x8xf32>
    %377 = vector.broadcast %376 : vector<1x8xf32> to vector<8x8xf32>
    %378 = arith.addf %375, %377 : vector<8x8xf32>
    %379 = arith.negf %378 : vector<8x8xf32>
    %380 = math.exp %379 : vector<8x8xf32>
    %cst_111 = arith.constant 1.000000e+00 : f32
    %381 = vector.broadcast %cst_111 : f32 to vector<8x8xf32>
    %382 = arith.addf %381, %380 : vector<8x8xf32>
    %383 = arith.divf %381, %382 : vector<8x8xf32>
    %c0_112 = arith.constant 0 : index
    %c0_113 = arith.constant 0 : index
    %384 = vector.load %arg13[%c0_112, %c0_113] : memref<8x8xf32, #tpu.memory_space<vmem>>, vector<8x8xf32>
    tpu.vector_store %arg13[%c0_112, %c0_113], %383 {strides = array<i32>} : memref<8x8xf32, #tpu.memory_space<vmem>>, vector<8x8xf32>,
    return
  }
}

</mosaic_0001>

<llo_original>
// kernel: tpu_custom_call.1
$region0: #{tpu_custom_call.1}
  #allocation0 [shape = 'u32[]', space=smem, size = 0x4, offset = 0x4, fixed_abs, tag = 'smem constant byte address 0x4 - core index']
  #allocation1 [shape = 'u32[144,128]{1,0:T(1,128)}', space=vmem, size = 0x12000, scoped, tag = 'internal scratch']
  %s0 = inlined_call_operand.vmem [shape: f32[64,32], index: 0, kind: input, shape index: {}]
  %s1 = inlined_call_operand.vmem [shape: f32[8,4], index: 1, kind: input, shape index: {}]
  %s2 = inlined_call_operand.hbm [shape: f32[2,8,32], index: 2, kind: input, shape index: {}]
  %s3 = inlined_call_operand.hbm [shape: f32[2,8,32], index: 3, kind: input, shape index: {}]
  %s4 = inlined_call_operand.vmem [shape: f32[32,128], index: 4, kind: input, shape index: {}]
  %s5 = inlined_call_operand.vmem [shape: f32[32,128], index: 5, kind: input, shape index: {}]
  %s6 = inlined_call_operand.vmem [shape: f32[1,128], index: 6, kind: input, shape index: {}]
  %s7 = inlined_call_operand.vmem [shape: f32[32,128], index: 7, kind: input, shape index: {}]
  %s8 = inlined_call_operand.vmem [shape: f32[32,128], index: 8, kind: input, shape index: {}]
  %s9 = inlined_call_operand.vmem [shape: f32[1,128], index: 9, kind: input, shape index: {}]
  %s10 = inlined_call_operand.vmem [shape: f32[32,8], index: 10, kind: input, shape index: {}]
  %s11 = inlined_call_operand.vmem [shape: f32[4,8], index: 11, kind: input, shape index: {}]
  %s12 = inlined_call_operand.vmem [shape: f32[1,8], index: 12, kind: input, shape index: {}]
  %s13 = inlined_call_operand.hbm [shape: f32[8,8], index: 13, kind: output, shape index: {0}]
  %s14 = inlined_call_operand.hbm [shape: f32[2,8,32], index: 14, kind: output, shape index: {1}]
  %s15 = inlined_call_operand.hbm [shape: f32[2,8,32], index: 15, kind: output, shape index: {2}]
  %16 = xla_tuple %s13, %s14, %s15
  %s17 = sld [smem:[#allocation0]]
  $region86: #{tpu_custom_call.1} parent=0
    _
  %s19 = ssub.s32 1, %s17
  %s20 = scalar_select 0, %s19, %s17
  $region1: #{tpu_custom_call.1} parent=0
    #allocation2 [shape = 'u8[8192]{0}', space=vmem, size = 0x2000, scoped, tag = 'input window, operand 2, single buffered']
    #allocation3 [shape = 's32[1]{0}', space=sflag, size = 0x4, scoped, tag = 'scoped memory for tpu_custom_call.1']
    #allocation4 [shape = 's32[1]{0}', space=sflag, size = 0x4, scoped, tag = 'scoped memory for tpu_custom_call.1']
    #allocation5 [shape = 'u8[8192]{0}', space=vmem, size = 0x2000, scoped, tag = 'input window, operand 3, single buffered']
    #allocation6 [shape = 's32[1]{0}', space=sflag, size = 0x4, scoped, tag = 'scoped memory for tpu_custom_call.1']
    #allocation7 [shape = 'u8[4096]{0}', space=vmem, size = 0x1000, scoped, tag = 'output window, operand 0, single buffered']
    #allocation8 [shape = 'u8[8192]{0}', space=vmem, size = 0x2000, scoped, tag = 'output window, operand 1, single buffered']
    #allocation9 [shape = 's32[1]{0}', space=sflag, size = 0x4, scoped, tag = 'scoped memory for tpu_custom_call.1']
    #allocation10 [shape = 'u8[8192]{0}', space=vmem, size = 0x2000, scoped, tag = 'output window, operand 2, single buffered']
    %21 = vsyncpa [#allocation3], 0
    %22 = vsyncpa [#allocation6], 0
    %23 = vsyncpa [#allocation4], 0
    %24 = vsyncpa [#allocation9], 0
    // Predicated region
    $region2: #{tpu_custom_call.1} parent=1 // pred_check
      _
    $region3: #{tpu_custom_call.1} parent=1 // pred_check_branch
      %26 = sbr.rel (0) target = $region5
    $region4: #{tpu_custom_call.1} parent=1 // pred_region
      _
    $region5: #{tpu_custom_call.1} parent=1 // pred_fallthru
      _
    // Predicated region
    $region6: #{tpu_custom_call.1} parent=1 // pred_check
      _
    $region7: #{tpu_custom_call.1} parent=1 // pred_check_branch
      %28 = sbr.rel (0) target = $region9
    $region8: #{tpu_custom_call.1} parent=1 // pred_region
      _
    $region9: #{tpu_custom_call.1} parent=1 // pred_fallthru
      _
    // Predicated region
    $region10: #{tpu_custom_call.1} parent=1 // pred_check
      _
    $region11: #{tpu_custom_call.1} parent=1 // pred_check_branch
      %30 = sbr.rel (0) target = $region13
    $region12: #{tpu_custom_call.1} parent=1 // pred_region
      %s32 = ssub.s32 256, 256
      %33 = vsyncadd [#allocation3], %s32
      %s34 = sshll.u32 [#allocation2], 4
      %s35 = int_to_ptr.vmem [resolvable:$true] %s34
      %40 = dma.hbm_to_vmem [thread:$0]  %s2, 256, %s35, [#allocation3], 128, 128, 8
    $region13: #{tpu_custom_call.1} parent=1 // pred_fallthru
      _
    // Predicated region
    $region14: #{tpu_custom_call.1} parent=1 // pred_check
      _
    $region15: #{tpu_custom_call.1} parent=1 // pred_check_branch
      %42 = sbr.rel (0) target = $region17
    $region16: #{tpu_custom_call.1} parent=1 // pred_region
      %s44 = ssub.s32 256, 256
      %45 = vsyncadd [#allocation6], %s44
      %s46 = sshll.u32 [#allocation5], 4
      %s47 = int_to_ptr.vmem [resolvable:$true] %s46
      %52 = dma.hbm_to_vmem [thread:$0]  %s3, 256, %s47, [#allocation6], 128, 128, 8
    $region17: #{tpu_custom_call.1} parent=1 // pred_fallthru
      _
    // Predicated region
    $region18: #{tpu_custom_call.1} parent=1 // pred_check
      _
    $region19: #{tpu_custom_call.1} parent=1 // pred_check_branch
      %54 = sbr.rel (0) target = $region21
    $region20: #{tpu_custom_call.1} parent=1 // pred_region
      _
    $region21: #{tpu_custom_call.1} parent=1 // pred_fallthru
      _
    // Predicated region
    $region22: #{tpu_custom_call.1} parent=1 // pred_check
      _
    $region23: #{tpu_custom_call.1} parent=1 // pred_check_branch
      %56 = sbr.rel (0) target = $region25
    $region24: #{tpu_custom_call.1} parent=1 // pred_region
      _
    $region25: #{tpu_custom_call.1} parent=1 // pred_fallthru
      _
    // Predicated region
    $region26: #{tpu_custom_call.1} parent=1 // pred_check
      _
    $region27: #{tpu_custom_call.1} parent=1 // pred_check_branch
      %58 = sbr.rel (0) target = $region29
    $region28: #{tpu_custom_call.1} parent=1 // pred_region
      _
    $region29: #{tpu_custom_call.1} parent=1 // pred_fallthru
      _
    // Predicated region
    $region30: #{tpu_custom_call.1} parent=1 // pred_check
      _
    $region31: #{tpu_custom_call.1} parent=1 // pred_check_branch
      %60 = sbr.rel (0) target = $region33
    $region32: #{tpu_custom_call.1} parent=1 // pred_region
      _
    $region33: #{tpu_custom_call.1} parent=1 // pred_fallthru
      _
    // Predicated region
    $region34: #{tpu_custom_call.1} parent=1 // pred_check
      _
    $region35: #{tpu_custom_call.1} parent=1 // pred_check_branch
      %62 = sbr.rel (0) target = $region37
    $region36: #{tpu_custom_call.1} parent=1 // pred_region
      _
    $region37: #{tpu_custom_call.1} parent=1 // pred_fallthru
      _
    // Predicated region
    $region38: #{tpu_custom_call.1} parent=1 // pred_check
      _
    $region39: #{tpu_custom_call.1} parent=1 // pred_check_branch
      %64 = sbr.rel (0) target = $region41
    $region40: #{tpu_custom_call.1} parent=1 // pred_region
      _
    $region41: #{tpu_custom_call.1} parent=1 // pred_fallthru
      _
    // Predicated region
    $region42: #{tpu_custom_call.1} parent=1 // pred_check
      _
    $region43: #{tpu_custom_call.1} parent=1 // pred_check_branch
      %66 = sbr.rel (0) target = $region45
    $region44: #{tpu_custom_call.1} parent=1 // pred_region
      _
    $region45: #{tpu_custom_call.1} parent=1 // pred_fallthru
      _
    // Predicated region
    $region46: #{tpu_custom_call.1} parent=1 // pred_check
      _
    $region47: #{tpu_custom_call.1} parent=1 // pred_check_branch
      %68 = sbr.rel (0) target = $region49
    $region48: #{tpu_custom_call.1} parent=1 // pred_region
      _
    $region49: #{tpu_custom_call.1} parent=1 // pred_fallthru
      _
    // Predicated region
    $region50: #{tpu_custom_call.1} parent=1 // pred_check
      _
    $region51: #{tpu_custom_call.1} parent=1 // pred_check_branch
      %70 = sbr.rel (0) target = $region53
    $region52: #{tpu_custom_call.1} parent=1 // pred_region
      _
    $region53: #{tpu_custom_call.1} parent=1 // pred_fallthru
      _
    // Predicated region
    $region54: #{tpu_custom_call.1} parent=1 // pred_check
      _
    $region55: #{tpu_custom_call.1} parent=1 // pred_check_branch
      %72 = sbr.rel (0) target = $region57
    $region56: #{tpu_custom_call.1} parent=1 // pred_region
      %73 = dma.done [#allocation3], 256
    $region57: #{tpu_custom_call.1} parent=1 // pred_fallthru
      _
    // Predicated region
    $region58: #{tpu_custom_call.1} parent=1 // pred_check
      _
    $region59: #{tpu_custom_call.1} parent=1 // pred_check_branch
      %75 = sbr.rel (0) target = $region61
    $region60: #{tpu_custom_call.1} parent=1 // pred_region
      %76 = dma.done [#allocation6], 256
    $region61: #{tpu_custom_call.1} parent=1 // pred_fallthru
      _
    %v77 = vld [vmem:[%s0] sm:$0xff]
    %v78 = vld [vmem:[%s0 + $0x8] sm:$0xff]
    %v79 = vld [vmem:[%s0 + $0x10] sm:$0xff]
    %v80 = vld [vmem:[%s0 + $0x18] sm:$0xff]
    %v81 = vld [vmem:[%s0 + $0x20] sm:$0xff]
    %v82 = vld [vmem:[%s0 + $0x28] sm:$0xff]
    %v83 = vld [vmem:[%s0 + $0x30] sm:$0xff]
    %v84 = vld [vmem:[%s0 + $0x38] sm:$0xff]
    %v85 = vld [vmem:[%s4] sm:$0xff]
    %v86 = vld [vmem:[%s4 + $0x8] sm:$0xff]
    %v87 = vld [vmem:[%s4 + $0x10] sm:$0xff]
    %v88 = vld [vmem:[%s4 + $0x18] sm:$0xff]
    %v89 = vld [vmem:[%s5] sm:$0xff]
    %v90 = vld [vmem:[%s5 + $0x8] sm:$0xff]
    %v91 = vld [vmem:[%s5 + $0x10] sm:$0xff]
    %v92 = vld [vmem:[%s5 + $0x18] sm:$0xff]
    %v93 = vld [vmem:[%s6] sm:$0x1]
    %v95 = vlaneseq
    %v96 = vshrl.u32 %v95, 7
    %v97 = vsub.s32 0, %v96
    %v98 = vrot.slane %v93, %v97
    %vm100 = vcmask 261120
    %v102 = vsel %vm100, %v77, 0
    %v105 = vsel %vm100, %v78, 0
    %v108 = vsel %vm100, %v79, 0
    %v111 = vsel %vm100, %v80, 0
    %v114 = vsel %vm100, %v81, 0
    %v117 = vsel %vm100, %v82, 0
    %v120 = vsel %vm100, %v83, 0
    %v123 = vsel %vm100, %v84, 0
    %125 = vmatprep.subr.mxu0 0.0
    %126 = vmatpush1.msra.mxu0 %v85
    %127 = vmatprep.subr.mxu0 0.0
    %128 = vmatpush1.msra.mxu0 %v86
    %129 = vmatprep.subr.mxu0 0.0
    %130 = vmatpush1.msra.mxu0 %v87
    %131 = vmatprep.subr.mxu0 0.0
    %132 = vmatpush1.msra.mxu0 %v88
    %133 = vmatprep.subr.mxu0 0.0
    %134 = vmatpush1.msra.mxu0 0.0
    %135 = vmatprep.subr.mxu0 0.0
    %136 = vmatpush1.msra.mxu0 0.0
    %137 = vmatprep.subr.mxu0 0.0
    %138 = vmatpush1.msra.mxu0 0.0
    %139 = vmatprep.subr.mxu0 0.0
    %140 = vmatpush1.msra.mxu0 0.0
    %141 = vmatprep.subr.mxu0 0.0
    %142 = vmatpush1.msra.mxu0 0.0
    %143 = vmatprep.subr.mxu0 0.0
    %144 = vmatpush1.msra.mxu0 0.0
    %145 = vmatprep.subr.mxu0 0.0
    %146 = vmatpush1.msra.mxu0 0.0
    %147 = vmatprep.subr.mxu0 0.0
    %148 = vmatpush1.msra.mxu0 0.0
    %149 = vmatprep.subr.mxu0 0.0
    %150 = vmatpush1.msra.mxu0 0.0
    %151 = vmatprep.subr.mxu0 0.0
    %152 = vmatpush1.msra.mxu0 0.0
    %153 = vmatprep.subr.mxu0 0.0
    %154 = vmatpush1.msra.mxu0 0.0
    %155 = vmatprep.subr.mxu0 0.0
    %156 = vmatpush1.msra.mxu0 0.0
    %157 = vmatprep.subr.mxu0 0.0
    %158 = vmatpush1.msra.mxu0 0.0
    %159 = vmatprep.subr.mxu0 0.0
    %160 = vmatpush1.msra.mxu0 0.0
    %161 = vmatprep.subr.mxu0 0.0
    %162 = vmatpush1.msra.mxu0 0.0
    %163 = vmatprep.subr.mxu0 0.0
    %164 = vmatpush1.msra.mxu0 0.0
    %165 = vmatprep.subr.mxu0 0.0
    %166 = vmatpush1.msra.mxu0 0.0
    %167 = vmatprep.subr.mxu0 0.0
    %168 = vmatpush1.msra.mxu0 0.0
    %169 = vmatprep.subr.mxu0 0.0
    %170 = vmatpush1.msra.mxu0 0.0
    %171 = vmatprep.subr.mxu0 0.0
    %172 = vmatpush1.msra.mxu0 0.0
    %173 = vmatprep.subr.mxu0 0.0
    %174 = vmatpush1.msra.mxu0 0.0
    %175 = vmatprep.subr.mxu0 0.0
    %176 = vmatpush1.msra.mxu0 0.0
    %177 = vmatprep.subr.mxu0 0.0
    %178 = vmatpush1.msra.mxu0 0.0
    %179 = vmatprep.subr.mxu0 0.0
    %180 = vmatpush1.msra.mxu0 0.0
    %181 = vmatprep.subr.mxu0 0.0
    %182 = vmatpush1.msra.mxu0 0.0
    %183 = vmatprep.subr.mxu0 0.0
    %184 = vmatpush1.msra.mxu0 0.0
    %185 = vmatprep.subr.mxu0 0.0
    %186 = vmatpush1.msra.mxu0 0.0
    %187 = vmatprep.subr.mxu0 0.0
    %188 = vmatpush1.msra.mxu0 0.0
    %189 = vmatprep.mubr.f32.mxu0 0.0
    %190 = vmatmul.mubr.f32.gmra.mrb[0].mxu0 %v102
    %v191 = vpop.f32.mrb[0].mxu0
    %v192 = vadd.f32 %v98, %v191
    %v193 = vpop.f32.mrb[0].mxu0
    %194 = vmatprep.mubr.f32.mxu0 0.0
    %195 = vmatmul.mubr.f32.gmra.mrb[0].mxu0 %v105
    %v196 = vpop.f32.mrb[0].mxu0
    %v197 = vadd.f32 %v98, %v196
    %v198 = vpop.f32.mrb[0].mxu0
    %199 = vmatprep.mubr.f32.mxu0 0.0
    %200 = vmatmul.mubr.f32.gmra.mrb[0].mxu0 %v108
    %v201 = vpop.f32.mrb[0].mxu0
    %v202 = vadd.f32 %v98, %v201
    %v203 = vpop.f32.mrb[0].mxu0
    %204 = vmatprep.mubr.f32.mxu0 0.0
    %205 = vmatmul.mubr.f32.gmra.mrb[0].mxu0 %v111
    %v206 = vpop.f32.mrb[0].mxu0
    %v207 = vadd.f32 %v98, %v206
    %v208 = vpop.f32.mrb[0].mxu0
    %209 = vmatprep.mubr.f32.mxu0 0.0
    %210 = vmatmul.mubr.f32.gmra.mrb[0].mxu0 %v114
    %v211 = vpop.f32.mrb[0].mxu0
    %v212 = vadd.f32 %v98, %v211
    %v213 = vpop.f32.mrb[0].mxu0
    %214 = vmatprep.mubr.f32.mxu0 0.0
    %215 = vmatmul.mubr.f32.gmra.mrb[0].mxu0 %v117
    %v216 = vpop.f32.mrb[0].mxu0
    %v217 = vadd.f32 %v98, %v216
    %v218 = vpop.f32.mrb[0].mxu0
    %219 = vmatprep.mubr.f32.mxu0 0.0
    %220 = vmatmul.mubr.f32.gmra.mrb[0].mxu0 %v120
    %v221 = vpop.f32.mrb[0].mxu0
    %v222 = vadd.f32 %v98, %v221
    %v223 = vpop.f32.mrb[0].mxu0
    %224 = vmatprep.mubr.f32.mxu0 0.0
    %225 = vmatmul.mubr.f32.gmra.mrb[0].mxu0 %v123
    %v226 = vpop.f32.mrb[0].mxu0
    %v227 = vadd.f32 %v98, %v226
    %v228 = vpop.f32.mrb[0].mxu0
    %229 = vdwg.mxu0
    %v230 = vld [vmem:[#allocation2] sm:$0xff]
    %v231 = vld [vmem:[#allocation5] sm:$0xff]
    %v233 = vsel %vm100, %v230, 0
    %235 = vmatprep.subr.mxu0 0.0
    %236 = vmatpush1.msra.mxu0 %v89
    %237 = vmatprep.subr.mxu0 0.0
    %238 = vmatpush1.msra.mxu0 %v90
    %239 = vmatprep.subr.mxu0 0.0
    %240 = vmatpush1.msra.mxu0 %v91
    %241 = vmatprep.subr.mxu0 0.0
    %242 = vmatpush1.msra.mxu0 %v92
    %243 = vmatprep.subr.mxu0 0.0
    %244 = vmatpush1.msra.mxu0 0.0
    %245 = vmatprep.subr.mxu0 0.0
    %246 = vmatpush1.msra.mxu0 0.0
    %247 = vmatprep.subr.mxu0 0.0
    %248 = vmatpush1.msra.mxu0 0.0
    %249 = vmatprep.subr.mxu0 0.0
    %250 = vmatpush1.msra.mxu0 0.0
    %251 = vmatprep.subr.mxu0 0.0
    %252 = vmatpush1.msra.mxu0 0.0
    %253 = vmatprep.subr.mxu0 0.0
    %254 = vmatpush1.msra.mxu0 0.0
    %255 = vmatprep.subr.mxu0 0.0
    %256 = vmatpush1.msra.mxu0 0.0
    %257 = vmatprep.subr.mxu0 0.0
    %258 = vmatpush1.msra.mxu0 0.0
    %259 = vmatprep.subr.mxu0 0.0
    %260 = vmatpush1.msra.mxu0 0.0
    %261 = vmatprep.subr.mxu0 0.0
    %262 = vmatpush1.msra.mxu0 0.0
    %263 = vmatprep.subr.mxu0 0.0
    %264 = vmatpush1.msra.mxu0 0.0
    %265 = vmatprep.subr.mxu0 0.0
    %266 = vmatpush1.msra.mxu0 0.0
    %267 = vmatprep.subr.mxu0 0.0
    %268 = vmatpush1.msra.mxu0 0.0
    %269 = vmatprep.subr.mxu0 0.0
    %270 = vmatpush1.msra.mxu0 0.0
    %271 = vmatprep.subr.mxu0 0.0
    %272 = vmatpush1.msra.mxu0 0.0
    %273 = vmatprep.subr.mxu0 0.0
    %274 = vmatpush1.msra.mxu0 0.0
    %275 = vmatprep.subr.mxu0 0.0
    %276 = vmatpush1.msra.mxu0 0.0
    %277 = vmatprep.subr.mxu0 0.0
    %278 = vmatpush1.msra.mxu0 0.0
    %279 = vmatprep.subr.mxu0 0.0
    %280 = vmatpush1.msra.mxu0 0.0
    %281 = vmatprep.subr.mxu0 0.0
    %282 = vmatpush1.msra.mxu0 0.0
    %283 = vmatprep.subr.mxu0 0.0
    %284 = vmatpush1.msra.mxu0 0.0
    %285 = vmatprep.subr.mxu0 0.0
    %286 = vmatpush1.msra.mxu0 0.0
    %287 = vmatprep.subr.mxu0 0.0
    %288 = vmatpush1.msra.mxu0 0.0
    %289 = vmatprep.subr.mxu0 0.0
    %290 = vmatpush1.msra.mxu0 0.0
    %291 = vmatprep.subr.mxu0 0.0
    %292 = vmatpush1.msra.mxu0 0.0
    %293 = vmatprep.subr.mxu0 0.0
    %294 = vmatpush1.msra.mxu0 0.0
    %295 = vmatprep.subr.mxu0 0.0
    %296 = vmatpush1.msra.mxu0 0.0
    %297 = vmatprep.subr.mxu0 0.0
    %298 = vmatpush1.msra.mxu0 0.0
    %299 = vmatprep.mubr.f32.mxu0 0.0
    %300 = vmatmul.mubr.f32.gmra.mrb[0].mxu0 %v233
    %v301 = vpop.f32.mrb[0].mxu0
    %v302 = vadd.f32 0.0, %v301
    %v303 = vpop.f32.mrb[0].mxu0
    %304 = vdwg.mxu0
    %v305 = vadd.f32 %v192, %v302
    %v306 = vxor.u32 %v305, 2147483648
    %v307 = vmul.f32 %v306, 1.442695
    %v308 = vpow.pop %v307
    %v309 = vadd.f32 %v308, 1.0
    %v310 = vrcp.pop %v309
    %v311 = vmul.f32 1.0, %v310
    %v312 = vmul.f32 %v311, 2.0
    %v313 = vsub.f32 %v312, 1.0
    %315 = vrot.lane.b32.xlu0 %v231, 32
    %v316 = vpop.permute.xlu0 %315
    %v318 = vmul.f32 %v311, %v316
    %320 = vrot.lane.b32.xlu0 %v313, 64
    %v321 = vpop.permute.xlu0 %320
    %v323 = vmul.f32 %v311, %v321
    %325 = vrot.lane.b32.xlu0 %v323, 32
    %v326 = vpop.permute.xlu0 %325
    %v328 = vadd.f32 %v318, %v326
    %v329 = vtanh.pop %v328
    %331 = vrot.lane.b32.xlu0 %v329, 64
    %v332 = vpop.permute.xlu0 %331
    %v334 = vmul.f32 %v311, %v332
    %336 = vrot.lane.b32.xlu0 %v334, 32
    %v337 = vpop.permute.xlu0 %336
    %v338 = vsel %vm100, %v337, 0
    %340 = vmatprep.subr.mxu0 0.0
    %341 = vmatpush1.msra.mxu0 %v89
    %342 = vmatprep.subr.mxu0 0.0
    %343 = vmatpush1.msra.mxu0 %v90
    %344 = vmatprep.subr.mxu0 0.0
    %345 = vmatpush1.msra.mxu0 %v91
    %346 = vmatprep.subr.mxu0 0.0
    %347 = vmatpush1.msra.mxu0 %v92
    %348 = vmatprep.subr.mxu0 0.0
    %349 = vmatpush1.msra.mxu0 0.0
    %350 = vmatprep.subr.mxu0 0.0
    %351 = vmatpush1.msra.mxu0 0.0
    %352 = vmatprep.subr.mxu0 0.0
    %353 = vmatpush1.msra.mxu0 0.0
    %354 = vmatprep.subr.mxu0 0.0
    %355 = vmatpush1.msra.mxu0 0.0
    %356 = vmatprep.subr.mxu0 0.0
    %357 = vmatpush1.msra.mxu0 0.0
    %358 = vmatprep.subr.mxu0 0.0
    %359 = vmatpush1.msra.mxu0 0.0
    %360 = vmatprep.subr.mxu0 0.0
    %361 = vmatpush1.msra.mxu0 0.0
    %362 = vmatprep.subr.mxu0 0.0
    %363 = vmatpush1.msra.mxu0 0.0
    %364 = vmatprep.subr.mxu0 0.0
    %365 = vmatpush1.msra.mxu0 0.0
    %366 = vmatprep.subr.mxu0 0.0
    %367 = vmatpush1.msra.mxu0 0.0
    %368 = vmatprep.subr.mxu0 0.0
    %369 = vmatpush1.msra.mxu0 0.0
    %370 = vmatprep.subr.mxu0 0.0
    %371 = vmatpush1.msra.mxu0 0.0
    %372 = vmatprep.subr.mxu0 0.0
    %373 = vmatpush1.msra.mxu0 0.0
    %374 = vmatprep.subr.mxu0 0.0
    %375 = vmatpush1.msra.mxu0 0.0
    %376 = vmatprep.subr.mxu0 0.0
    %377 = vmatpush1.msra.mxu0 0.0
    %378 = vmatprep.subr.mxu0 0.0
    %379 = vmatpush1.msra.mxu0 0.0
    %380 = vmatprep.subr.mxu0 0.0
    %381 = vmatpush1.msra.mxu0 0.0
    %382 = vmatprep.subr.mxu0 0.0
    %383 = vmatpush1.msra.mxu0 0.0
    %384 = vmatprep.subr.mxu0 0.0
    %385 = vmatpush1.msra.mxu0 0.0
    %386 = vmatprep.subr.mxu0 0.0
    %387 = vmatpush1.msra.mxu0 0.0
    %388 = vmatprep.subr.mxu0 0.0
    %389 = vmatpush1.msra.mxu0 0.0
    %390 = vmatprep.subr.mxu0 0.0
    %391 = vmatpush1.msra.mxu0 0.0
    %392 = vmatprep.subr.mxu0 0.0
    %393 = vmatpush1.msra.mxu0 0.0
    %394 = vmatprep.subr.mxu0 0.0
    %395 = vmatpush1.msra.mxu0 0.0
    %396 = vmatprep.subr.mxu0 0.0
    %397 = vmatpush1.msra.mxu0 0.0
    %398 = vmatprep.subr.mxu0 0.0
    %399 = vmatpush1.msra.mxu0 0.0
    %400 = vmatprep.subr.mxu0 0.0
    %401 = vmatpush1.msra.mxu0 0.0
    %402 = vmatprep.subr.mxu0 0.0
    %403 = vmatpush1.msra.mxu0 0.0
    %404 = vmatprep.mubr.f32.mxu0 0.0
    %405 = vmatmul.mubr.f32.gmra.mrb[0].mxu0 %v338
    %v406 = vpop.f32.mrb[0].mxu0
    %v407 = vadd.f32 0.0, %v406
    %v408 = vpop.f32.mrb[0].mxu0
    %409 = vdwg.mxu0
    %v410 = vadd.f32 %v197, %v407
    %v411 = vxor.u32 %v410, 2147483648
    %v412 = vmul.f32 %v411, 1.442695
    %v413 = vpow.pop %v412
    %v414 = vadd.f32 %v413, 1.0
    %v415 = vrcp.pop %v414
    %v416 = vmul.f32 1.0, %v415
    %v417 = vmul.f32 %v416, 2.0
    %v418 = vsub.f32 %v417, 1.0
    %v419 = vmul.f32 %v416, %v328
    %421 = vrot.lane.b32.xlu0 %v418, 64
    %v422 = vpop.permute.xlu0 %421
    %v424 = vmul.f32 %v416, %v422
    %426 = vrot.lane.b32.xlu0 %v424, 32
    %v427 = vpop.permute.xlu0 %426
    %v429 = vadd.f32 %v419, %v427
    %v430 = vtanh.pop %v429
    %432 = vrot.lane.b32.xlu0 %v430, 64
    %v433 = vpop.permute.xlu0 %432
    %v435 = vmul.f32 %v416, %v433
    %437 = vrot.lane.b32.xlu0 %v435, 32
    %v438 = vpop.permute.xlu0 %437
    %v439 = vsel %vm100, %v438, 0
    %441 = vmatprep.subr.mxu0 0.0
    %442 = vmatpush1.msra.mxu0 %v89
    %443 = vmatprep.subr.mxu0 0.0
    %444 = vmatpush1.msra.mxu0 %v90
    %445 = vmatprep.subr.mxu0 0.0
    %446 = vmatpush1.msra.mxu0 %v91
    %447 = vmatprep.subr.mxu0 0.0
    %448 = vmatpush1.msra.mxu0 %v92
    %449 = vmatprep.subr.mxu0 0.0
    %450 = vmatpush1.msra.mxu0 0.0
    %451 = vmatprep.subr.mxu0 0.0
    %452 = vmatpush1.msra.mxu0 0.0
    %453 = vmatprep.subr.mxu0 0.0
    %454 = vmatpush1.msra.mxu0 0.0
    %455 = vmatprep.subr.mxu0 0.0
    %456 = vmatpush1.msra.mxu0 0.0
    %457 = vmatprep.subr.mxu0 0.0
    %458 = vmatpush1.msra.mxu0 0.0
    %459 = vmatprep.subr.mxu0 0.0
    %460 = vmatpush1.msra.mxu0 0.0
    %461 = vmatprep.subr.mxu0 0.0
    %462 = vmatpush1.msra.mxu0 0.0
    %463 = vmatprep.subr.mxu0 0.0
    %464 = vmatpush1.msra.mxu0 0.0
    %465 = vmatprep.subr.mxu0 0.0
    %466 = vmatpush1.msra.mxu0 0.0
    %467 = vmatprep.subr.mxu0 0.0
    %468 = vmatpush1.msra.mxu0 0.0
    %469 = vmatprep.subr.mxu0 0.0
    %470 = vmatpush1.msra.mxu0 0.0
    %471 = vmatprep.subr.mxu0 0.0
    %472 = vmatpush1.msra.mxu0 0.0
    %473 = vmatprep.subr.mxu0 0.0
    %474 = vmatpush1.msra.mxu0 0.0
    %475 = vmatprep.subr.mxu0 0.0
    %476 = vmatpush1.msra.mxu0 0.0
    %477 = vmatprep.subr.mxu0 0.0
    %478 = vmatpush1.msra.mxu0 0.0
    %479 = vmatprep.subr.mxu0 0.0
    %480 = vmatpush1.msra.mxu0 0.0
    %481 = vmatprep.subr.mxu0 0.0
    %482 = vmatpush1.msra.mxu0 0.0
    %483 = vmatprep.subr.mxu0 0.0
    %484 = vmatpush1.msra.mxu0 0.0
    %485 = vmatprep.subr.mxu0 0.0
    %486 = vmatpush1.msra.mxu0 0.0
    %487 = vmatprep.subr.mxu0 0.0
    %488 = vmatpush1.msra.mxu0 0.0
    %489 = vmatprep.subr.mxu0 0.0
    %490 = vmatpush1.msra.mxu0 0.0
    %491 = vmatprep.subr.mxu0 0.0
    %492 = vmatpush1.msra.mxu0 0.0
    %493 = vmatprep.subr.mxu0 0.0
    %494 = vmatpush1.msra.mxu0 0.0
    %495 = vmatprep.subr.mxu0 0.0
    %496 = vmatpush1.msra.mxu0 0.0
    %497 = vmatprep.subr.mxu0 0.0
    %498 = vmatpush1.msra.mxu0 0.0
    %499 = vmatprep.subr.mxu0 0.0
    %500 = vmatpush1.msra.mxu0 0.0
    %501 = vmatprep.subr.mxu0 0.0
    %502 = vmatpush1.msra.mxu0 0.0
    %503 = vmatprep.subr.mxu0 0.0
    %504 = vmatpush1.msra.mxu0 0.0
    %505 = vmatprep.mubr.f32.mxu0 0.0
    %506 = vmatmul.mubr.f32.gmra.mrb[0].mxu0 %v439
    %v507 = vpop.f32.mrb[0].mxu0
    %v508 = vadd.f32 0.0, %v507
    %v509 = vpop.f32.mrb[0].mxu0
    %510 = vdwg.mxu0
    %v511 = vadd.f32 %v202, %v508
    %v512 = vxor.u32 %v511, 2147483648
    %v513 = vmul.f32 %v512, 1.442695
    %v514 = vpow.pop %v513
    %v515 = vadd.f32 %v514, 1.0
    %v516 = vrcp.pop %v515
    %v517 = vmul.f32 1.0, %v516
    %v518 = vmul.f32 %v517, 2.0
    %v519 = vsub.f32 %v518, 1.0
    %v520 = vmul.f32 %v517, %v429
    %522 = vrot.lane.b32.xlu0 %v519, 64
    %v523 = vpop.permute.xlu0 %522
    %v525 = vmul.f32 %v517, %v523
    %527 = vrot.lane.b32.xlu0 %v525, 32
    %v528 = vpop.permute.xlu0 %527
    %v530 = vadd.f32 %v520, %v528
    %v531 = vtanh.pop %v530
    %533 = vrot.lane.b32.xlu0 %v531, 64
    %v534 = vpop.permute.xlu0 %533
    %v536 = vmul.f32 %v517, %v534
    %538 = vrot.lane.b32.xlu0 %v536, 32
    %v539 = vpop.permute.xlu0 %538
    %v540 = vsel %vm100, %v539, 0
    %542 = vmatprep.subr.mxu0 0.0
    %543 = vmatpush1.msra.mxu0 %v89
    %544 = vmatprep.subr.mxu0 0.0
    %545 = vmatpush1.msra.mxu0 %v90
    %546 = vmatprep.subr.mxu0 0.0
    %547 = vmatpush1.msra.mxu0 %v91
    %548 = vmatprep.subr.mxu0 0.0
    %549 = vmatpush1.msra.mxu0 %v92
    %550 = vmatprep.subr.mxu0 0.0
    %551 = vmatpush1.msra.mxu0 0.0
    %552 = vmatprep.subr.mxu0 0.0
    %553 = vmatpush1.msra.mxu0 0.0
    %554 = vmatprep.subr.mxu0 0.0
    %555 = vmatpush1.msra.mxu0 0.0
    %556 = vmatprep.subr.mxu0 0.0
    %557 = vmatpush1.msra.mxu0 0.0
    %558 = vmatprep.subr.mxu0 0.0
    %559 = vmatpush1.msra.mxu0 0.0
    %560 = vmatprep.subr.mxu0 0.0
    %561 = vmatpush1.msra.mxu0 0.0
    %562 = vmatprep.subr.mxu0 0.0
    %563 = vmatpush1.msra.mxu0 0.0
    %564 = vmatprep.subr.mxu0 0.0
    %565 = vmatpush1.msra.mxu0 0.0
    %566 = vmatprep.subr.mxu0 0.0
    %567 = vmatpush1.msra.mxu0 0.0
    %568 = vmatprep.subr.mxu0 0.0
    %569 = vmatpush1.msra.mxu0 0.0
    %570 = vmatprep.subr.mxu0 0.0
    %571 = vmatpush1.msra.mxu0 0.0
    %572 = vmatprep.subr.mxu0 0.0
    %573 = vmatpush1.msra.mxu0 0.0
    %574 = vmatprep.subr.mxu0 0.0
    %575 = vmatpush1.msra.mxu0 0.0
    %576 = vmatprep.subr.mxu0 0.0
    %577 = vmatpush1.msra.mxu0 0.0
    %578 = vmatprep.subr.mxu0 0.0
    %579 = vmatpush1.msra.mxu0 0.0
    %580 = vmatprep.subr.mxu0 0.0
    %581 = vmatpush1.msra.mxu0 0.0
    %582 = vmatprep.subr.mxu0 0.0
    %583 = vmatpush1.msra.mxu0 0.0
    %584 = vmatprep.subr.mxu0 0.0
    %585 = vmatpush1.msra.mxu0 0.0
    %586 = vmatprep.subr.mxu0 0.0
    %587 = vmatpush1.msra.mxu0 0.0
    %588 = vmatprep.subr.mxu0 0.0
    %589 = vmatpush1.msra.mxu0 0.0
    %590 = vmatprep.subr.mxu0 0.0
    %591 = vmatpush1.msra.mxu0 0.0
    %592 = vmatprep.subr.mxu0 0.0
    %593 = vmatpush1.msra.mxu0 0.0
    %594 = vmatprep.subr.mxu0 0.0
    %595 = vmatpush1.msra.mxu0 0.0
    %596 = vmatprep.subr.mxu0 0.0
    %597 = vmatpush1.msra.mxu0 0.0
    %598 = vmatprep.subr.mxu0 0.0
    %599 = vmatpush1.msra.mxu0 0.0
    %600 = vmatprep.subr.mxu0 0.0
    %601 = vmatpush1.msra.mxu0 0.0
    %602 = vmatprep.subr.mxu0 0.0
    %603 = vmatpush1.msra.mxu0 0.0
    %604 = vmatprep.subr.mxu0 0.0
    %605 = vmatpush1.msra.mxu0 0.0
    %606 = vmatprep.mubr.f32.mxu0 0.0
    %607 = vmatmul.mubr.f32.gmra.mrb[0].mxu0 %v540
    %v608 = vpop.f32.mrb[0].mxu0
    %v609 = vadd.f32 0.0, %v608
    %v610 = vpop.f32.mrb[0].mxu0
    %611 = vdwg.mxu0
    %v612 = vadd.f32 %v207, %v609
    %v613 = vxor.u32 %v612, 2147483648
    %v614 = vmul.f32 %v613, 1.442695
    %v615 = vpow.pop %v614
    %v616 = vadd.f32 %v615, 1.0
    %v617 = vrcp.pop %v616
    %v618 = vmul.f32 1.0, %v617
    %v619 = vmul.f32 %v618, 2.0
    %v620 = vsub.f32 %v619, 1.0
    %v621 = vmul.f32 %v618, %v530
    %623 = vrot.lane.b32.xlu0 %v620, 64
    %v624 = vpop.permute.xlu0 %623
    %v626 = vmul.f32 %v618, %v624
    %628 = vrot.lane.b32.xlu0 %v626, 32
    %v629 = vpop.permute.xlu0 %628
    %v631 = vadd.f32 %v621, %v629
    %v632 = vtanh.pop %v631
    %634 = vrot.lane.b32.xlu0 %v632, 64
    %v635 = vpop.permute.xlu0 %634
    %v637 = vmul.f32 %v618, %v635
    %639 = vrot.lane.b32.xlu0 %v637, 32
    %v640 = vpop.permute.xlu0 %639
    %v641 = vsel %vm100, %v640, 0
    %643 = vmatprep.subr.mxu0 0.0
    %644 = vmatpush1.msra.mxu0 %v89
    %645 = vmatprep.subr.mxu0 0.0
    %646 = vmatpush1.msra.mxu0 %v90
    %647 = vmatprep.subr.mxu0 0.0
    %648 = vmatpush1.msra.mxu0 %v91
    %649 = vmatprep.subr.mxu0 0.0
    %650 = vmatpush1.msra.mxu0 %v92
    %651 = vmatprep.subr.mxu0 0.0
    %652 = vmatpush1.msra.mxu0 0.0
    %653 = vmatprep.subr.mxu0 0.0
    %654 = vmatpush1.msra.mxu0 0.0
    %655 = vmatprep.subr.mxu0 0.0
    %656 = vmatpush1.msra.mxu0 0.0
    %657 = vmatprep.subr.mxu0 0.0
    %658 = vmatpush1.msra.mxu0 0.0
    %659 = vmatprep.subr.mxu0 0.0
    %660 = vmatpush1.msra.mxu0 0.0
    %661 = vmatprep.subr.mxu0 0.0
    %662 = vmatpush1.msra.mxu0 0.0
    %663 = vmatprep.subr.mxu0 0.0
    %664 = vmatpush1.msra.mxu0 0.0
    %665 = vmatprep.subr.mxu0 0.0
    %666 = vmatpush1.msra.mxu0 0.0
    %667 = vmatprep.subr.mxu0 0.0
    %668 = vmatpush1.msra.mxu0 0.0
    %669 = vmatprep.subr.mxu0 0.0
    %670 = vmatpush1.msra.mxu0 0.0
    %671 = vmatprep.subr.mxu0 0.0
    %672 = vmatpush1.msra.mxu0 0.0
    %673 = vmatprep.subr.mxu0 0.0
    %674 = vmatpush1.msra.mxu0 0.0
    %675 = vmatprep.subr.mxu0 0.0
    %676 = vmatpush1.msra.mxu0 0.0
    %677 = vmatprep.subr.mxu0 0.0
    %678 = vmatpush1.msra.mxu0 0.0
    %679 = vmatprep.subr.mxu0 0.0
    %680 = vmatpush1.msra.mxu0 0.0
    %681 = vmatprep.subr.mxu0 0.0
    %682 = vmatpush1.msra.mxu0 0.0
    %683 = vmatprep.subr.mxu0 0.0
    %684 = vmatpush1.msra.mxu0 0.0
    %685 = vmatprep.subr.mxu0 0.0
    %686 = vmatpush1.msra.mxu0 0.0
    %687 = vmatprep.subr.mxu0 0.0
    %688 = vmatpush1.msra.mxu0 0.0
    %689 = vmatprep.subr.mxu0 0.0
    %690 = vmatpush1.msra.mxu0 0.0
    %691 = vmatprep.subr.mxu0 0.0
    %692 = vmatpush1.msra.mxu0 0.0
    %693 = vmatprep.subr.mxu0 0.0
    %694 = vmatpush1.msra.mxu0 0.0
    %695 = vmatprep.subr.mxu0 0.0
    %696 = vmatpush1.msra.mxu0 0.0
    %697 = vmatprep.subr.mxu0 0.0
    %698 = vmatpush1.msra.mxu0 0.0
    %699 = vmatprep.subr.mxu0 0.0
    %700 = vmatpush1.msra.mxu0 0.0
    %701 = vmatprep.subr.mxu0 0.0
    %702 = vmatpush1.msra.mxu0 0.0
    %703 = vmatprep.subr.mxu0 0.0
    %704 = vmatpush1.msra.mxu0 0.0
    %705 = vmatprep.subr.mxu0 0.0
    %706 = vmatpush1.msra.mxu0 0.0
    %707 = vmatprep.mubr.f32.mxu0 0.0
    %708 = vmatmul.mubr.f32.gmra.mrb[0].mxu0 %v641
    %v709 = vpop.f32.mrb[0].mxu0
    %v710 = vadd.f32 0.0, %v709
    %v711 = vpop.f32.mrb[0].mxu0
    %712 = vdwg.mxu0
    %v713 = vadd.f32 %v212, %v710
    %v714 = vxor.u32 %v713, 2147483648
    %v715 = vmul.f32 %v714, 1.442695
    %v716 = vpow.pop %v715
    %v717 = vadd.f32 %v716, 1.0
    %v718 = vrcp.pop %v717
    %v719 = vmul.f32 1.0, %v718
    %v720 = vmul.f32 %v719, 2.0
    %v721 = vsub.f32 %v720, 1.0
    %v722 = vmul.f32 %v719, %v631
    %724 = vrot.lane.b32.xlu0 %v721, 64
    %v725 = vpop.permute.xlu0 %724
    %v727 = vmul.f32 %v719, %v725
    %729 = vrot.lane.b32.xlu0 %v727, 32
    %v730 = vpop.permute.xlu0 %729
    %v732 = vadd.f32 %v722, %v730
    %v733 = vtanh.pop %v732
    %735 = vrot.lane.b32.xlu0 %v733, 64
    %v736 = vpop.permute.xlu0 %735
    %v738 = vmul.f32 %v719, %v736
    %740 = vrot.lane.b32.xlu0 %v738, 32
    %v741 = vpop.permute.xlu0 %740
    %v742 = vsel %vm100, %v741, 0
    %744 = vmatprep.subr.mxu0 0.0
    %745 = vmatpush1.msra.mxu0 %v89
    %746 = vmatprep.subr.mxu0 0.0
    %747 = vmatpush1.msra.mxu0 %v90
    %748 = vmatprep.subr.mxu0 0.0
    %749 = vmatpush1.msra.mxu0 %v91
    %750 = vmatprep.subr.mxu0 0.0
    %751 = vmatpush1.msra.mxu0 %v92
    %752 = vmatprep.subr.mxu0 0.0
    %753 = vmatpush1.msra.mxu0 0.0
    %754 = vmatprep.subr.mxu0 0.0
    %755 = vmatpush1.msra.mxu0 0.0
    %756 = vmatprep.subr.mxu0 0.0
    %757 = vmatpush1.msra.mxu0 0.0
    %758 = vmatprep.subr.mxu0 0.0
    %759 = vmatpush1.msra.mxu0 0.0
    %760 = vmatprep.subr.mxu0 0.0
    %761 = vmatpush1.msra.mxu0 0.0
    %762 = vmatprep.subr.mxu0 0.0
    %763 = vmatpush1.msra.mxu0 0.0
    %764 = vmatprep.subr.mxu0 0.0
    %765 = vmatpush1.msra.mxu0 0.0
    %766 = vmatprep.subr.mxu0 0.0
    %767 = vmatpush1.msra.mxu0 0.0
    %768 = vmatprep.subr.mxu0 0.0
    %769 = vmatpush1.msra.mxu0 0.0
    %770 = vmatprep.subr.mxu0 0.0
    %771 = vmatpush1.msra.mxu0 0.0
    %772 = vmatprep.subr.mxu0 0.0
    %773 = vmatpush1.msra.mxu0 0.0
    %774 = vmatprep.subr.mxu0 0.0
    %775 = vmatpush1.msra.mxu0 0.0
    %776 = vmatprep.subr.mxu0 0.0
    %777 = vmatpush1.msra.mxu0 0.0
    %778 = vmatprep.subr.mxu0 0.0
    %779 = vmatpush1.msra.mxu0 0.0
    %780 = vmatprep.subr.mxu0 0.0
    %781 = vmatpush1.msra.mxu0 0.0
    %782 = vmatprep.subr.mxu0 0.0
    %783 = vmatpush1.msra.mxu0 0.0
    %784 = vmatprep.subr.mxu0 0.0
    %785 = vmatpush1.msra.mxu0 0.0
    %786 = vmatprep.subr.mxu0 0.0
    %787 = vmatpush1.msra.mxu0 0.0
    %788 = vmatprep.subr.mxu0 0.0
    %789 = vmatpush1.msra.mxu0 0.0
    %790 = vmatprep.subr.mxu0 0.0
    %791 = vmatpush1.msra.mxu0 0.0
    %792 = vmatprep.subr.mxu0 0.0
    %793 = vmatpush1.msra.mxu0 0.0
    %794 = vmatprep.subr.mxu0 0.0
    %795 = vmatpush1.msra.mxu0 0.0
    %796 = vmatprep.subr.mxu0 0.0
    %797 = vmatpush1.msra.mxu0 0.0
    %798 = vmatprep.subr.mxu0 0.0
    %799 = vmatpush1.msra.mxu0 0.0
    %800 = vmatprep.subr.mxu0 0.0
    %801 = vmatpush1.msra.mxu0 0.0
    %802 = vmatprep.subr.mxu0 0.0
    %803 = vmatpush1.msra.mxu0 0.0
    %804 = vmatprep.subr.mxu0 0.0
    %805 = vmatpush1.msra.mxu0 0.0
    %806 = vmatprep.subr.mxu0 0.0
    %807 = vmatpush1.msra.mxu0 0.0
    %808 = vmatprep.mubr.f32.mxu0 0.0
    %809 = vmatmul.mubr.f32.gmra.mrb[0].mxu0 %v742
    %v810 = vpop.f32.mrb[0].mxu0
    %v811 = vadd.f32 0.0, %v810
    %v812 = vpop.f32.mrb[0].mxu0
    %813 = vdwg.mxu0
    %v814 = vadd.f32 %v217, %v811
    %v815 = vxor.u32 %v814, 2147483648
    %v816 = vmul.f32 %v815, 1.442695
    %v817 = vpow.pop %v816
    %v818 = vadd.f32 %v817, 1.0
    %v819 = vrcp.pop %v818
    %v820 = vmul.f32 1.0, %v819
    %v821 = vmul.f32 %v820, 2.0
    %v822 = vsub.f32 %v821, 1.0
    %v823 = vmul.f32 %v820, %v732
    %825 = vrot.lane.b32.xlu0 %v822, 64
    %v826 = vpop.permute.xlu0 %825
    %v828 = vmul.f32 %v820, %v826
    %830 = vrot.lane.b32.xlu0 %v828, 32
    %v831 = vpop.permute.xlu0 %830
    %v833 = vadd.f32 %v823, %v831
    %v834 = vtanh.pop %v833
    %836 = vrot.lane.b32.xlu0 %v834, 64
    %v837 = vpop.permute.xlu0 %836
    %v839 = vmul.f32 %v820, %v837
    %841 = vrot.lane.b32.xlu0 %v839, 32
    %v842 = vpop.permute.xlu0 %841
    %v843 = vsel %vm100, %v842, 0
    %845 = vmatprep.subr.mxu0 0.0
    %846 = vmatpush1.msra.mxu0 %v89
    %847 = vmatprep.subr.mxu0 0.0
    %848 = vmatpush1.msra.mxu0 %v90
    %849 = vmatprep.subr.mxu0 0.0
    %850 = vmatpush1.msra.mxu0 %v91
    %851 = vmatprep.subr.mxu0 0.0
    %852 = vmatpush1.msra.mxu0 %v92
    %853 = vmatprep.subr.mxu0 0.0
    %854 = vmatpush1.msra.mxu0 0.0
    %855 = vmatprep.subr.mxu0 0.0
    %856 = vmatpush1.msra.mxu0 0.0
    %857 = vmatprep.subr.mxu0 0.0
    %858 = vmatpush1.msra.mxu0 0.0
    %859 = vmatprep.subr.mxu0 0.0
    %860 = vmatpush1.msra.mxu0 0.0
    %861 = vmatprep.subr.mxu0 0.0
    %862 = vmatpush1.msra.mxu0 0.0
    %863 = vmatprep.subr.mxu0 0.0
    %864 = vmatpush1.msra.mxu0 0.0
    %865 = vmatprep.subr.mxu0 0.0
    %866 = vmatpush1.msra.mxu0 0.0
    %867 = vmatprep.subr.mxu0 0.0
    %868 = vmatpush1.msra.mxu0 0.0
    %869 = vmatprep.subr.mxu0 0.0
    %870 = vmatpush1.msra.mxu0 0.0
    %871 = vmatprep.subr.mxu0 0.0
    %872 = vmatpush1.msra.mxu0 0.0
    %873 = vmatprep.subr.mxu0 0.0
    %874 = vmatpush1.msra.mxu0 0.0
    %875 = vmatprep.subr.mxu0 0.0
    %876 = vmatpush1.msra.mxu0 0.0
    %877 = vmatprep.subr.mxu0 0.0
    %878 = vmatpush1.msra.mxu0 0.0
    %879 = vmatprep.subr.mxu0 0.0
    %880 = vmatpush1.msra.mxu0 0.0
    %881 = vmatprep.subr.mxu0 0.0
    %882 = vmatpush1.msra.mxu0 0.0
    %883 = vmatprep.subr.mxu0 0.0
    %884 = vmatpush1.msra.mxu0 0.0
    %885 = vmatprep.subr.mxu0 0.0
    %886 = vmatpush1.msra.mxu0 0.0
    %887 = vmatprep.subr.mxu0 0.0
    %888 = vmatpush1.msra.mxu0 0.0
    %889 = vmatprep.subr.mxu0 0.0
    %890 = vmatpush1.msra.mxu0 0.0
    %891 = vmatprep.subr.mxu0 0.0
    %892 = vmatpush1.msra.mxu0 0.0
    %893 = vmatprep.subr.mxu0 0.0
    %894 = vmatpush1.msra.mxu0 0.0
    %895 = vmatprep.subr.mxu0 0.0
    %896 = vmatpush1.msra.mxu0 0.0
    %897 = vmatprep.subr.mxu0 0.0
    %898 = vmatpush1.msra.mxu0 0.0
    %899 = vmatprep.subr.mxu0 0.0
    %900 = vmatpush1.msra.mxu0 0.0
    %901 = vmatprep.subr.mxu0 0.0
    %902 = vmatpush1.msra.mxu0 0.0
    %903 = vmatprep.subr.mxu0 0.0
    %904 = vmatpush1.msra.mxu0 0.0
    %905 = vmatprep.subr.mxu0 0.0
    %906 = vmatpush1.msra.mxu0 0.0
    %907 = vmatprep.subr.mxu0 0.0
    %908 = vmatpush1.msra.mxu0 0.0
    %909 = vmatprep.mubr.f32.mxu0 0.0
    %910 = vmatmul.mubr.f32.gmra.mrb[0].mxu0 %v843
    %v911 = vpop.f32.mrb[0].mxu0
    %v912 = vadd.f32 0.0, %v911
    %v913 = vpop.f32.mrb[0].mxu0
    %914 = vdwg.mxu0
    %v915 = vadd.f32 %v222, %v912
    %v916 = vxor.u32 %v915, 2147483648
    %v917 = vmul.f32 %v916, 1.442695
    %v918 = vpow.pop %v917
    %v919 = vadd.f32 %v918, 1.0
    %v920 = vrcp.pop %v919
    %v921 = vmul.f32 1.0, %v920
    %v922 = vmul.f32 %v921, 2.0
    %v923 = vsub.f32 %v922, 1.0
    %v924 = vmul.f32 %v921, %v833
    %926 = vrot.lane.b32.xlu0 %v923, 64
    %v927 = vpop.permute.xlu0 %926
    %v929 = vmul.f32 %v921, %v927
    %931 = vrot.lane.b32.xlu0 %v929, 32
    %v932 = vpop.permute.xlu0 %931
    %v934 = vadd.f32 %v924, %v932
    %v935 = vtanh.pop %v934
    %937 = vrot.lane.b32.xlu0 %v935, 64
    %v938 = vpop.permute.xlu0 %937
    %v940 = vmul.f32 %v921, %v938
    %942 = vrot.lane.b32.xlu0 %v940, 32
    %v943 = vpop.permute.xlu0 %942
    %v944 = vsel %vm100, %v943, 0
    %946 = vmatprep.subr.mxu0 0.0
    %947 = vmatpush1.msra.mxu0 %v89
    %948 = vmatprep.subr.mxu0 0.0
    %949 = vmatpush1.msra.mxu0 %v90
    %950 = vmatprep.subr.mxu0 0.0
    %951 = vmatpush1.msra.mxu0 %v91
    %952 = vmatprep.subr.mxu0 0.0
    %953 = vmatpush1.msra.mxu0 %v92
    %954 = vmatprep.subr.mxu0 0.0
    %955 = vmatpush1.msra.mxu0 0.0
    %956 = vmatprep.subr.mxu0 0.0
    %957 = vmatpush1.msra.mxu0 0.0
    %958 = vmatprep.subr.mxu0 0.0
    %959 = vmatpush1.msra.mxu0 0.0
    %960 = vmatprep.subr.mxu0 0.0
    %961 = vmatpush1.msra.mxu0 0.0
    %962 = vmatprep.subr.mxu0 0.0
    %963 = vmatpush1.msra.mxu0 0.0
    %964 = vmatprep.subr.mxu0 0.0
    %965 = vmatpush1.msra.mxu0 0.0
    %966 = vmatprep.subr.mxu0 0.0
    %967 = vmatpush1.msra.mxu0 0.0
    %968 = vmatprep.subr.mxu0 0.0
    %969 = vmatpush1.msra.mxu0 0.0
    %970 = vmatprep.subr.mxu0 0.0
    %971 = vmatpush1.msra.mxu0 0.0
    %972 = vmatprep.subr.mxu0 0.0
    %973 = vmatpush1.msra.mxu0 0.0
    %974 = vmatprep.subr.mxu0 0.0
    %975 = vmatpush1.msra.mxu0 0.0
    %976 = vmatprep.subr.mxu0 0.0
    %977 = vmatpush1.msra.mxu0 0.0
    %978 = vmatprep.subr.mxu0 0.0
    %979 = vmatpush1.msra.mxu0 0.0
    %980 = vmatprep.subr.mxu0 0.0
    %981 = vmatpush1.msra.mxu0 0.0
    %982 = vmatprep.subr.mxu0 0.0
    %983 = vmatpush1.msra.mxu0 0.0
    %984 = vmatprep.subr.mxu0 0.0
    %985 = vmatpush1.msra.mxu0 0.0
    %986 = vmatprep.subr.mxu0 0.0
    %987 = vmatpush1.msra.mxu0 0.0
    %988 = vmatprep.subr.mxu0 0.0
    %989 = vmatpush1.msra.mxu0 0.0
    %990 = vmatprep.subr.mxu0 0.0
    %991 = vmatpush1.msra.mxu0 0.0
    %992 = vmatprep.subr.mxu0 0.0
    %993 = vmatpush1.msra.mxu0 0.0
    %994 = vmatprep.subr.mxu0 0.0
    %995 = vmatpush1.msra.mxu0 0.0
    %996 = vmatprep.subr.mxu0 0.0
    %997 = vmatpush1.msra.mxu0 0.0
    %998 = vmatprep.subr.mxu0 0.0
    %999 = vmatpush1.msra.mxu0 0.0
    %1000 = vmatprep.subr.mxu0 0.0
    %1001 = vmatpush1.msra.mxu0 0.0
    %1002 = vmatprep.subr.mxu0 0.0
    %1003 = vmatpush1.msra.mxu0 0.0
    %1004 = vmatprep.subr.mxu0 0.0
    %1005 = vmatpush1.msra.mxu0 0.0
    %1006 = vmatprep.subr.mxu0 0.0
    %1007 = vmatpush1.msra.mxu0 0.0
    %1008 = vmatprep.subr.mxu0 0.0
    %1009 = vmatpush1.msra.mxu0 0.0
    %1010 = vmatprep.mubr.f32.mxu0 0.0
    %1011 = vmatmul.mubr.f32.gmra.mrb[0].mxu0 %v944
    %v1012 = vpop.f32.mrb[0].mxu0
    %v1013 = vadd.f32 0.0, %v1012
    %v1014 = vpop.f32.mrb[0].mxu0
    %1015 = vdwg.mxu0
    %v1016 = vadd.f32 %v227, %v1013
    %v1017 = vxor.u32 %v1016, 2147483648
    %v1018 = vmul.f32 %v1017, 1.442695
    %v1019 = vpow.pop %v1018
    %v1020 = vadd.f32 %v1019, 1.0
    %v1021 = vrcp.pop %v1020
    %v1022 = vmul.f32 1.0, %v1021
    %v1023 = vmul.f32 %v1022, 2.0
    %v1024 = vsub.f32 %v1023, 1.0
    %v1025 = vmul.f32 %v1022, %v934
    %1027 = vrot.lane.b32.xlu0 %v1024, 64
    %v1028 = vpop.permute.xlu0 %1027
    %v1030 = vmul.f32 %v1022, %v1028
    %1032 = vrot.lane.b32.xlu0 %v1030, 32
    %v1033 = vpop.permute.xlu0 %1032
    %v1035 = vadd.f32 %v1025, %v1033
    %v1036 = vtanh.pop %v1035
    %1038 = vrot.lane.b32.xlu0 %v1036, 64
    %v1039 = vpop.permute.xlu0 %1038
    %v1041 = vmul.f32 %v1022, %v1039
    %1043 = vrot.lane.b32.xlu0 %v1041, 32
    %v1044 = vpop.permute.xlu0 %1043
    %1046 = vst.msk [vmem:[#allocation8] sm:$0xff] %vm100, %v1044
    %1048 = vrot.lane.b32.xlu0 %v1035, 96
    %v1049 = vpop.permute.xlu0 %1048
    %1051 = vst.msk [vmem:[#allocation10] sm:$0xff] %vm100, %v1049
    %v1052 = vld [vmem:[%s7] sm:$0xff]
    %v1053 = vld [vmem:[%s7 + $0x8] sm:$0xff]
    %v1054 = vld [vmem:[%s7 + $0x10] sm:$0xff]
    %v1055 = vld [vmem:[%s7 + $0x18] sm:$0xff]
    %v1056 = vld [vmem:[%s8] sm:$0xff]
    %v1057 = vld [vmem:[%s8 + $0x8] sm:$0xff]
    %v1058 = vld [vmem:[%s8 + $0x10] sm:$0xff]
    %v1059 = vld [vmem:[%s8 + $0x18] sm:$0xff]
    %v1060 = vld [vmem:[%s9] sm:$0x1]
    %v1062 = vlaneseq
    %v1063 = vshrl.u32 %v1062, 7
    %v1064 = vsub.s32 0, %v1063
    %v1065 = vrot.slane %v1060, %v1064
    %v1067 = vsel %vm100, %v1044, 0
    %1069 = vmatprep.subr.mxu0 0.0
    %1070 = vmatpush1.msra.mxu0 %v1052
    %1071 = vmatprep.subr.mxu0 0.0
    %1072 = vmatpush1.msra.mxu0 %v1053
    %1073 = vmatprep.subr.mxu0 0.0
    %1074 = vmatpush1.msra.mxu0 %v1054
    %1075 = vmatprep.subr.mxu0 0.0
    %1076 = vmatpush1.msra.mxu0 %v1055
    %1077 = vmatprep.subr.mxu0 0.0
    %1078 = vmatpush1.msra.mxu0 0.0
    %1079 = vmatprep.subr.mxu0 0.0
    %1080 = vmatpush1.msra.mxu0 0.0
    %1081 = vmatprep.subr.mxu0 0.0
    %1082 = vmatpush1.msra.mxu0 0.0
    %1083 = vmatprep.subr.mxu0 0.0
    %1084 = vmatpush1.msra.mxu0 0.0
    %1085 = vmatprep.subr.mxu0 0.0
    %1086 = vmatpush1.msra.mxu0 0.0
    %1087 = vmatprep.subr.mxu0 0.0
    %1088 = vmatpush1.msra.mxu0 0.0
    %1089 = vmatprep.subr.mxu0 0.0
    %1090 = vmatpush1.msra.mxu0 0.0
    %1091 = vmatprep.subr.mxu0 0.0
    %1092 = vmatpush1.msra.mxu0 0.0
    %1093 = vmatprep.subr.mxu0 0.0
    %1094 = vmatpush1.msra.mxu0 0.0
    %1095 = vmatprep.subr.mxu0 0.0
    %1096 = vmatpush1.msra.mxu0 0.0
    %1097 = vmatprep.subr.mxu0 0.0
    %1098 = vmatpush1.msra.mxu0 0.0
    %1099 = vmatprep.subr.mxu0 0.0
    %1100 = vmatpush1.msra.mxu0 0.0
    %1101 = vmatprep.subr.mxu0 0.0
    %1102 = vmatpush1.msra.mxu0 0.0
    %1103 = vmatprep.subr.mxu0 0.0
    %1104 = vmatpush1.msra.mxu0 0.0
    %1105 = vmatprep.subr.mxu0 0.0
    %1106 = vmatpush1.msra.mxu0 0.0
    %1107 = vmatprep.subr.mxu0 0.0
    %1108 = vmatpush1.msra.mxu0 0.0
    %1109 = vmatprep.subr.mxu0 0.0
    %1110 = vmatpush1.msra.mxu0 0.0
    %1111 = vmatprep.subr.mxu0 0.0
    %1112 = vmatpush1.msra.mxu0 0.0
    %1113 = vmatprep.subr.mxu0 0.0
    %1114 = vmatpush1.msra.mxu0 0.0
    %1115 = vmatprep.subr.mxu0 0.0
    %1116 = vmatpush1.msra.mxu0 0.0
    %1117 = vmatprep.subr.mxu0 0.0
    %1118 = vmatpush1.msra.mxu0 0.0
    %1119 = vmatprep.subr.mxu0 0.0
    %1120 = vmatpush1.msra.mxu0 0.0
    %1121 = vmatprep.subr.mxu0 0.0
    %1122 = vmatpush1.msra.mxu0 0.0
    %1123 = vmatprep.subr.mxu0 0.0
    %1124 = vmatpush1.msra.mxu0 0.0
    %1125 = vmatprep.subr.mxu0 0.0
    %1126 = vmatpush1.msra.mxu0 0.0
    %1127 = vmatprep.subr.mxu0 0.0
    %1128 = vmatpush1.msra.mxu0 0.0
    %1129 = vmatprep.subr.mxu0 0.0
    %1130 = vmatpush1.msra.mxu0 0.0
    %1131 = vmatprep.subr.mxu0 0.0
    %1132 = vmatpush1.msra.mxu0 0.0
    %1133 = vmatprep.mubr.f32.mxu0 0.0
    %1134 = vmatmul.mubr.f32.gmra.mrb[0].mxu0 %v338
    %v1135 = vpop.f32.mrb[0].mxu0
    %v1136 = vadd.f32 %v1065, %v1135
    %v1137 = vpop.f32.mrb[0].mxu0
    %1138 = vmatprep.mubr.f32.mxu0 0.0
    %1139 = vmatmul.mubr.f32.gmra.mrb[0].mxu0 %v439
    %v1140 = vpop.f32.mrb[0].mxu0
    %v1141 = vadd.f32 %v1065, %v1140
    %v1142 = vpop.f32.mrb[0].mxu0
    %1143 = vmatprep.mubr.f32.mxu0 0.0
    %1144 = vmatmul.mubr.f32.gmra.mrb[0].mxu0 %v540
    %v1145 = vpop.f32.mrb[0].mxu0
    %v1146 = vadd.f32 %v1065, %v1145
    %v1147 = vpop.f32.mrb[0].mxu0
    %1148 = vmatprep.mubr.f32.mxu0 0.0
    %1149 = vmatmul.mubr.f32.gmra.mrb[0].mxu0 %v641
    %v1150 = vpop.f32.mrb[0].mxu0
    %v1151 = vadd.f32 %v1065, %v1150
    %v1152 = vpop.f32.mrb[0].mxu0
    %1153 = vmatprep.mubr.f32.mxu0 0.0
    %1154 = vmatmul.mubr.f32.gmra.mrb[0].mxu0 %v742
    %v1155 = vpop.f32.mrb[0].mxu0
    %v1156 = vadd.f32 %v1065, %v1155
    %v1157 = vpop.f32.mrb[0].mxu0
    %1158 = vmatprep.mubr.f32.mxu0 0.0
    %1159 = vmatmul.mubr.f32.gmra.mrb[0].mxu0 %v843
    %v1160 = vpop.f32.mrb[0].mxu0
    %v1161 = vadd.f32 %v1065, %v1160
    %v1162 = vpop.f32.mrb[0].mxu0
    %1163 = vmatprep.mubr.f32.mxu0 0.0
    %1164 = vmatmul.mubr.f32.gmra.mrb[0].mxu0 %v944
    %v1165 = vpop.f32.mrb[0].mxu0
    %v1166 = vadd.f32 %v1065, %v1165
    %v1167 = vpop.f32.mrb[0].mxu0
    %1168 = vmatprep.mubr.f32.mxu0 0.0
    %1169 = vmatmul.mubr.f32.gmra.mrb[0].mxu0 %v1067
    %v1170 = vpop.f32.mrb[0].mxu0
    %v1171 = vadd.f32 %v1065, %v1170
    %v1172 = vpop.f32.mrb[0].mxu0
    %1173 = vdwg.mxu0
    %s1174 = scalar_lea.vmem [#allocation2], 8
    %v1175 = vld [vmem:[%s1174] sm:$0xff]
    %s1176 = scalar_lea.vmem [#allocation5], 8
    %v1177 = vld [vmem:[%s1176] sm:$0xff]
    %v1179 = vsel %vm100, %v1175, 0
    %1181 = vmatprep.subr.mxu0 0.0
    %1182 = vmatpush1.msra.mxu0 %v1056
    %1183 = vmatprep.subr.mxu0 0.0
    %1184 = vmatpush1.msra.mxu0 %v1057
    %1185 = vmatprep.subr.mxu0 0.0
    %1186 = vmatpush1.msra.mxu0 %v1058
    %1187 = vmatprep.subr.mxu0 0.0
    %1188 = vmatpush1.msra.mxu0 %v1059
    %1189 = vmatprep.subr.mxu0 0.0
    %1190 = vmatpush1.msra.mxu0 0.0
    %1191 = vmatprep.subr.mxu0 0.0
    %1192 = vmatpush1.msra.mxu0 0.0
    %1193 = vmatprep.subr.mxu0 0.0
    %1194 = vmatpush1.msra.mxu0 0.0
    %1195 = vmatprep.subr.mxu0 0.0
    %1196 = vmatpush1.msra.mxu0 0.0
    %1197 = vmatprep.subr.mxu0 0.0
    %1198 = vmatpush1.msra.mxu0 0.0
    %1199 = vmatprep.subr.mxu0 0.0
    %1200 = vmatpush1.msra.mxu0 0.0
    %1201 = vmatprep.subr.mxu0 0.0
    %1202 = vmatpush1.msra.mxu0 0.0
    %1203 = vmatprep.subr.mxu0 0.0
    %1204 = vmatpush1.msra.mxu0 0.0
    %1205 = vmatprep.subr.mxu0 0.0
    %1206 = vmatpush1.msra.mxu0 0.0
    %1207 = vmatprep.subr.mxu0 0.0
    %1208 = vmatpush1.msra.mxu0 0.0
    %1209 = vmatprep.subr.mxu0 0.0
    %1210 = vmatpush1.msra.mxu0 0.0
    %1211 = vmatprep.subr.mxu0 0.0
    %1212 = vmatpush1.msra.mxu0 0.0
    %1213 = vmatprep.subr.mxu0 0.0
    %1214 = vmatpush1.msra.mxu0 0.0
    %1215 = vmatprep.subr.mxu0 0.0
    %1216 = vmatpush1.msra.mxu0 0.0
    %1217 = vmatprep.subr.mxu0 0.0
    %1218 = vmatpush1.msra.mxu0 0.0
    %1219 = vmatprep.subr.mxu0 0.0
    %1220 = vmatpush1.msra.mxu0 0.0
    %1221 = vmatprep.subr.mxu0 0.0
    %1222 = vmatpush1.msra.mxu0 0.0
    %1223 = vmatprep.subr.mxu0 0.0
    %1224 = vmatpush1.msra.mxu0 0.0
    %1225 = vmatprep.subr.mxu0 0.0
    %1226 = vmatpush1.msra.mxu0 0.0
    %1227 = vmatprep.subr.mxu0 0.0
    %1228 = vmatpush1.msra.mxu0 0.0
    %1229 = vmatprep.subr.mxu0 0.0
    %1230 = vmatpush1.msra.mxu0 0.0
    %1231 = vmatprep.subr.mxu0 0.0
    %1232 = vmatpush1.msra.mxu0 0.0
    %1233 = vmatprep.subr.mxu0 0.0
    %1234 = vmatpush1.msra.mxu0 0.0
    %1235 = vmatprep.subr.mxu0 0.0
    %1236 = vmatpush1.msra.mxu0 0.0
    %1237 = vmatprep.subr.mxu0 0.0
    %1238 = vmatpush1.msra.mxu0 0.0
    %1239 = vmatprep.subr.mxu0 0.0
    %1240 = vmatpush1.msra.mxu0 0.0
    %1241 = vmatprep.subr.mxu0 0.0
    %1242 = vmatpush1.msra.mxu0 0.0
    %1243 = vmatprep.subr.mxu0 0.0
    %1244 = vmatpush1.msra.mxu0 0.0
    %1245 = vmatprep.mubr.f32.mxu0 0.0
    %1246 = vmatmul.mubr.f32.gmra.mrb[0].mxu0 %v1179
    %v1247 = vpop.f32.mrb[0].mxu0
    %v1248 = vadd.f32 0.0, %v1247
    %v1249 = vpop.f32.mrb[0].mxu0
    %1250 = vdwg.mxu0
    %v1251 = vadd.f32 %v1136, %v1248
    %v1252 = vxor.u32 %v1251, 2147483648
    %v1253 = vmul.f32 %v1252, 1.442695
    %v1254 = vpow.pop %v1253
    %v1255 = vadd.f32 %v1254, 1.0
    %v1256 = vrcp.pop %v1255
    %v1257 = vmul.f32 1.0, %v1256
    %v1258 = vmul.f32 %v1257, 2.0
    %v1259 = vsub.f32 %v1258, 1.0
    %1261 = vrot.lane.b32.xlu0 %v1177, 32
    %v1262 = vpop.permute.xlu0 %1261
    %v1264 = vmul.f32 %v1257, %v1262
    %1266 = vrot.lane.b32.xlu0 %v1259, 64
    %v1267 = vpop.permute.xlu0 %1266
    %v1269 = vmul.f32 %v1257, %v1267
    %1271 = vrot.lane.b32.xlu0 %v1269, 32
    %v1272 = vpop.permute.xlu0 %1271
    %v1274 = vadd.f32 %v1264, %v1272
    %v1275 = vtanh.pop %v1274
    %1277 = vrot.lane.b32.xlu0 %v1275, 64
    %v1278 = vpop.permute.xlu0 %1277
    %v1280 = vmul.f32 %v1257, %v1278
    %1282 = vrot.lane.b32.xlu0 %v1280, 32
    %v1283 = vpop.permute.xlu0 %1282
    %v1284 = vsel %vm100, %v1283, 0
    %1286 = vmatprep.subr.mxu0 0.0
    %1287 = vmatpush1.msra.mxu0 %v1056
    %1288 = vmatprep.subr.mxu0 0.0
    %1289 = vmatpush1.msra.mxu0 %v1057
    %1290 = vmatprep.subr.mxu0 0.0
    %1291 = vmatpush1.msra.mxu0 %v1058
    %1292 = vmatprep.subr.mxu0 0.0
    %1293 = vmatpush1.msra.mxu0 %v1059
    %1294 = vmatprep.subr.mxu0 0.0
    %1295 = vmatpush1.msra.mxu0 0.0
    %1296 = vmatprep.subr.mxu0 0.0
    %1297 = vmatpush1.msra.mxu0 0.0
    %1298 = vmatprep.subr.mxu0 0.0
    %1299 = vmatpush1.msra.mxu0 0.0
    %1300 = vmatprep.subr.mxu0 0.0
    %1301 = vmatpush1.msra.mxu0 0.0
    %1302 = vmatprep.subr.mxu0 0.0
    %1303 = vmatpush1.msra.mxu0 0.0
    %1304 = vmatprep.subr.mxu0 0.0
    %1305 = vmatpush1.msra.mxu0 0.0
    %1306 = vmatprep.subr.mxu0 0.0
    %1307 = vmatpush1.msra.mxu0 0.0
    %1308 = vmatprep.subr.mxu0 0.0
    %1309 = vmatpush1.msra.mxu0 0.0
    %1310 = vmatprep.subr.mxu0 0.0
    %1311 = vmatpush1.msra.mxu0 0.0
    %1312 = vmatprep.subr.mxu0 0.0
    %1313 = vmatpush1.msra.mxu0 0.0
    %1314 = vmatprep.subr.mxu0 0.0
    %1315 = vmatpush1.msra.mxu0 0.0
    %1316 = vmatprep.subr.mxu0 0.0
    %1317 = vmatpush1.msra.mxu0 0.0
    %1318 = vmatprep.subr.mxu0 0.0
    %1319 = vmatpush1.msra.mxu0 0.0
    %1320 = vmatprep.subr.mxu0 0.0
    %1321 = vmatpush1.msra.mxu0 0.0
    %1322 = vmatprep.subr.mxu0 0.0
    %1323 = vmatpush1.msra.mxu0 0.0
    %1324 = vmatprep.subr.mxu0 0.0
    %1325 = vmatpush1.msra.mxu0 0.0
    %1326 = vmatprep.subr.mxu0 0.0
    %1327 = vmatpush1.msra.mxu0 0.0
    %1328 = vmatprep.subr.mxu0 0.0
    %1329 = vmatpush1.msra.mxu0 0.0
    %1330 = vmatprep.subr.mxu0 0.0
    %1331 = vmatpush1.msra.mxu0 0.0
    %1332 = vmatprep.subr.mxu0 0.0
    %1333 = vmatpush1.msra.mxu0 0.0
    %1334 = vmatprep.subr.mxu0 0.0
    %1335 = vmatpush1.msra.mxu0 0.0
    %1336 = vmatprep.subr.mxu0 0.0
    %1337 = vmatpush1.msra.mxu0 0.0
    %1338 = vmatprep.subr.mxu0 0.0
    %1339 = vmatpush1.msra.mxu0 0.0
    %1340 = vmatprep.subr.mxu0 0.0
    %1341 = vmatpush1.msra.mxu0 0.0
    %1342 = vmatprep.subr.mxu0 0.0
    %1343 = vmatpush1.msra.mxu0 0.0
    %1344 = vmatprep.subr.mxu0 0.0
    %1345 = vmatpush1.msra.mxu0 0.0
    %1346 = vmatprep.subr.mxu0 0.0
    %1347 = vmatpush1.msra.mxu0 0.0
    %1348 = vmatprep.subr.mxu0 0.0
    %1349 = vmatpush1.msra.mxu0 0.0
    %1350 = vmatprep.mubr.f32.mxu0 0.0
    %1351 = vmatmul.mubr.f32.gmra.mrb[0].mxu0 %v1284
    %v1352 = vpop.f32.mrb[0].mxu0
    %v1353 = vadd.f32 0.0, %v1352
    %v1354 = vpop.f32.mrb[0].mxu0
    %1355 = vdwg.mxu0
    %v1356 = vadd.f32 %v1141, %v1353
    %v1357 = vxor.u32 %v1356, 2147483648
    %v1358 = vmul.f32 %v1357, 1.442695
    %v1359 = vpow.pop %v1358
    %v1360 = vadd.f32 %v1359, 1.0
    %v1361 = vrcp.pop %v1360
    %v1362 = vmul.f32 1.0, %v1361
    %v1363 = vmul.f32 %v1362, 2.0
    %v1364 = vsub.f32 %v1363, 1.0
    %v1365 = vmul.f32 %v1362, %v1274
    %1367 = vrot.lane.b32.xlu0 %v1364, 64
    %v1368 = vpop.permute.xlu0 %1367
    %v1370 = vmul.f32 %v1362, %v1368
    %1372 = vrot.lane.b32.xlu0 %v1370, 32
    %v1373 = vpop.permute.xlu0 %1372
    %v1375 = vadd.f32 %v1365, %v1373
    %v1376 = vtanh.pop %v1375
    %1378 = vrot.lane.b32.xlu0 %v1376, 64
    %v1379 = vpop.permute.xlu0 %1378
    %v1381 = vmul.f32 %v1362, %v1379
    %1383 = vrot.lane.b32.xlu0 %v1381, 32
    %v1384 = vpop.permute.xlu0 %1383
    %v1385 = vsel %vm100, %v1384, 0
    %1387 = vmatprep.subr.mxu0 0.0
    %1388 = vmatpush1.msra.mxu0 %v1056
    %1389 = vmatprep.subr.mxu0 0.0
    %1390 = vmatpush1.msra.mxu0 %v1057
    %1391 = vmatprep.subr.mxu0 0.0
    %1392 = vmatpush1.msra.mxu0 %v1058
    %1393 = vmatprep.subr.mxu0 0.0
    %1394 = vmatpush1.msra.mxu0 %v1059
    %1395 = vmatprep.subr.mxu0 0.0
    %1396 = vmatpush1.msra.mxu0 0.0
    %1397 = vmatprep.subr.mxu0 0.0
    %1398 = vmatpush1.msra.mxu0 0.0
    %1399 = vmatprep.subr.mxu0 0.0
    %1400 = vmatpush1.msra.mxu0 0.0
    %1401 = vmatprep.subr.mxu0 0.0
    %1402 = vmatpush1.msra.mxu0 0.0
    %1403 = vmatprep.subr.mxu0 0.0
    %1404 = vmatpush1.msra.mxu0 0.0
    %1405 = vmatprep.subr.mxu0 0.0
    %1406 = vmatpush1.msra.mxu0 0.0
    %1407 = vmatprep.subr.mxu0 0.0
    %1408 = vmatpush1.msra.mxu0 0.0
    %1409 = vmatprep.subr.mxu0 0.0
    %1410 = vmatpush1.msra.mxu0 0.0
    %1411 = vmatprep.subr.mxu0 0.0
    %1412 = vmatpush1.msra.mxu0 0.0
    %1413 = vmatprep.subr.mxu0 0.0
    %1414 = vmatpush1.msra.mxu0 0.0
    %1415 = vmatprep.subr.mxu0 0.0
    %1416 = vmatpush1.msra.mxu0 0.0
    %1417 = vmatprep.subr.mxu0 0.0
    %1418 = vmatpush1.msra.mxu0 0.0
    %1419 = vmatprep.subr.mxu0 0.0
    %1420 = vmatpush1.msra.mxu0 0.0
    %1421 = vmatprep.subr.mxu0 0.0
    %1422 = vmatpush1.msra.mxu0 0.0
    %1423 = vmatprep.subr.mxu0 0.0
    %1424 = vmatpush1.msra.mxu0 0.0
    %1425 = vmatprep.subr.mxu0 0.0
    %1426 = vmatpush1.msra.mxu0 0.0
    %1427 = vmatprep.subr.mxu0 0.0
    %1428 = vmatpush1.msra.mxu0 0.0
    %1429 = vmatprep.subr.mxu0 0.0
    %1430 = vmatpush1.msra.mxu0 0.0
    %1431 = vmatprep.subr.mxu0 0.0
    %1432 = vmatpush1.msra.mxu0 0.0
    %1433 = vmatprep.subr.mxu0 0.0
    %1434 = vmatpush1.msra.mxu0 0.0
    %1435 = vmatprep.subr.mxu0 0.0
    %1436 = vmatpush1.msra.mxu0 0.0
    %1437 = vmatprep.subr.mxu0 0.0
    %1438 = vmatpush1.msra.mxu0 0.0
    %1439 = vmatprep.subr.mxu0 0.0
    %1440 = vmatpush1.msra.mxu0 0.0
    %1441 = vmatprep.subr.mxu0 0.0
    %1442 = vmatpush1.msra.mxu0 0.0
    %1443 = vmatprep.subr.mxu0 0.0
    %1444 = vmatpush1.msra.mxu0 0.0
    %1445 = vmatprep.subr.mxu0 0.0
    %1446 = vmatpush1.msra.mxu0 0.0
    %1447 = vmatprep.subr.mxu0 0.0
    %1448 = vmatpush1.msra.mxu0 0.0
    %1449 = vmatprep.subr.mxu0 0.0
    %1450 = vmatpush1.msra.mxu0 0.0
    %1451 = vmatprep.mubr.f32.mxu0 0.0
    %1452 = vmatmul.mubr.f32.gmra.mrb[0].mxu0 %v1385
    %v1453 = vpop.f32.mrb[0].mxu0
    %v1454 = vadd.f32 0.0, %v1453
    %v1455 = vpop.f32.mrb[0].mxu0
    %1456 = vdwg.mxu0
    %v1457 = vadd.f32 %v1146, %v1454
    %v1458 = vxor.u32 %v1457, 2147483648
    %v1459 = vmul.f32 %v1458, 1.442695
    %v1460 = vpow.pop %v1459
    %v1461 = vadd.f32 %v1460, 1.0
    %v1462 = vrcp.pop %v1461
    %v1463 = vmul.f32 1.0, %v1462
    %v1464 = vmul.f32 %v1463, 2.0
    %v1465 = vsub.f32 %v1464, 1.0
    %v1466 = vmul.f32 %v1463, %v1375
    %1468 = vrot.lane.b32.xlu0 %v1465, 64
    %v1469 = vpop.permute.xlu0 %1468
    %v1471 = vmul.f32 %v1463, %v1469
    %1473 = vrot.lane.b32.xlu0 %v1471, 32
    %v1474 = vpop.permute.xlu0 %1473
    %v1476 = vadd.f32 %v1466, %v1474
    %v1477 = vtanh.pop %v1476
    %1479 = vrot.lane.b32.xlu0 %v1477, 64
    %v1480 = vpop.permute.xlu0 %1479
    %v1482 = vmul.f32 %v1463, %v1480
    %1484 = vrot.lane.b32.xlu0 %v1482, 32
    %v1485 = vpop.permute.xlu0 %1484
    %v1486 = vsel %vm100, %v1485, 0
    %1488 = vmatprep.subr.mxu0 0.0
    %1489 = vmatpush1.msra.mxu0 %v1056
    %1490 = vmatprep.subr.mxu0 0.0
    %1491 = vmatpush1.msra.mxu0 %v1057
    %1492 = vmatprep.subr.mxu0 0.0
    %1493 = vmatpush1.msra.mxu0 %v1058
    %1494 = vmatprep.subr.mxu0 0.0
    %1495 = vmatpush1.msra.mxu0 %v1059
    %1496 = vmatprep.subr.mxu0 0.0
    %1497 = vmatpush1.msra.mxu0 0.0
    %1498 = vmatprep.subr.mxu0 0.0
    %1499 = vmatpush1.msra.mxu0 0.0
    %1500 = vmatprep.subr.mxu0 0.0
    %1501 = vmatpush1.msra.mxu0 0.0
    %1502 = vmatprep.subr.mxu0 0.0
    %1503 = vmatpush1.msra.mxu0 0.0
    %1504 = vmatprep.subr.mxu0 0.0
    %1505 = vmatpush1.msra.mxu0 0.0
    %1506 = vmatprep.subr.mxu0 0.0
    %1507 = vmatpush1.msra.mxu0 0.0
    %1508 = vmatprep.subr.mxu0 0.0
    %1509 = vmatpush1.msra.mxu0 0.0
    %1510 = vmatprep.subr.mxu0 0.0
    %1511 = vmatpush1.msra.mxu0 0.0
    %1512 = vmatprep.subr.mxu0 0.0
    %1513 = vmatpush1.msra.mxu0 0.0
    %1514 = vmatprep.subr.mxu0 0.0
    %1515 = vmatpush1.msra.mxu0 0.0
    %1516 = vmatprep.subr.mxu0 0.0
    %1517 = vmatpush1.msra.mxu0 0.0
    %1518 = vmatprep.subr.mxu0 0.0
    %1519 = vmatpush1.msra.mxu0 0.0
    %1520 = vmatprep.subr.mxu0 0.0
    %1521 = vmatpush1.msra.mxu0 0.0
    %1522 = vmatprep.subr.mxu0 0.0
    %1523 = vmatpush1.msra.mxu0 0.0
    %1524 = vmatprep.subr.mxu0 0.0
    %1525 = vmatpush1.msra.mxu0 0.0
    %1526 = vmatprep.subr.mxu0 0.0
    %1527 = vmatpush1.msra.mxu0 0.0
    %1528 = vmatprep.subr.mxu0 0.0
    %1529 = vmatpush1.msra.mxu0 0.0
    %1530 = vmatprep.subr.mxu0 0.0
    %1531 = vmatpush1.msra.mxu0 0.0
    %1532 = vmatprep.subr.mxu0 0.0
    %1533 = vmatpush1.msra.mxu0 0.0
    %1534 = vmatprep.subr.mxu0 0.0
    %1535 = vmatpush1.msra.mxu0 0.0
    %1536 = vmatprep.subr.mxu0 0.0
    %1537 = vmatpush1.msra.mxu0 0.0
    %1538 = vmatprep.subr.mxu0 0.0
    %1539 = vmatpush1.msra.mxu0 0.0
    %1540 = vmatprep.subr.mxu0 0.0
    %1541 = vmatpush1.msra.mxu0 0.0
    %1542 = vmatprep.subr.mxu0 0.0
    %1543 = vmatpush1.msra.mxu0 0.0
    %1544 = vmatprep.subr.mxu0 0.0
    %1545 = vmatpush1.msra.mxu0 0.0
    %1546 = vmatprep.subr.mxu0 0.0
    %1547 = vmatpush1.msra.mxu0 0.0
    %1548 = vmatprep.subr.mxu0 0.0
    %1549 = vmatpush1.msra.mxu0 0.0
    %1550 = vmatprep.subr.mxu0 0.0
    %1551 = vmatpush1.msra.mxu0 0.0
    %1552 = vmatprep.mubr.f32.mxu0 0.0
    %1553 = vmatmul.mubr.f32.gmra.mrb[0].mxu0 %v1486
    %v1554 = vpop.f32.mrb[0].mxu0
    %v1555 = vadd.f32 0.0, %v1554
    %v1556 = vpop.f32.mrb[0].mxu0
    %1557 = vdwg.mxu0
    %v1558 = vadd.f32 %v1151, %v1555
    %v1559 = vxor.u32 %v1558, 2147483648
    %v1560 = vmul.f32 %v1559, 1.442695
    %v1561 = vpow.pop %v1560
    %v1562 = vadd.f32 %v1561, 1.0
    %v1563 = vrcp.pop %v1562
    %v1564 = vmul.f32 1.0, %v1563
    %v1565 = vmul.f32 %v1564, 2.0
    %v1566 = vsub.f32 %v1565, 1.0
    %v1567 = vmul.f32 %v1564, %v1476
    %1569 = vrot.lane.b32.xlu0 %v1566, 64
    %v1570 = vpop.permute.xlu0 %1569
    %v1572 = vmul.f32 %v1564, %v1570
    %1574 = vrot.lane.b32.xlu0 %v1572, 32
    %v1575 = vpop.permute.xlu0 %1574
    %v1577 = vadd.f32 %v1567, %v1575
    %v1578 = vtanh.pop %v1577
    %1580 = vrot.lane.b32.xlu0 %v1578, 64
    %v1581 = vpop.permute.xlu0 %1580
    %v1583 = vmul.f32 %v1564, %v1581
    %1585 = vrot.lane.b32.xlu0 %v1583, 32
    %v1586 = vpop.permute.xlu0 %1585
    %v1587 = vsel %vm100, %v1586, 0
    %1589 = vmatprep.subr.mxu0 0.0
    %1590 = vmatpush1.msra.mxu0 %v1056
    %1591 = vmatprep.subr.mxu0 0.0
    %1592 = vmatpush1.msra.mxu0 %v1057
    %1593 = vmatprep.subr.mxu0 0.0
    %1594 = vmatpush1.msra.mxu0 %v1058
    %1595 = vmatprep.subr.mxu0 0.0
    %1596 = vmatpush1.msra.mxu0 %v1059
    %1597 = vmatprep.subr.mxu0 0.0
    %1598 = vmatpush1.msra.mxu0 0.0
    %1599 = vmatprep.subr.mxu0 0.0
    %1600 = vmatpush1.msra.mxu0 0.0
    %1601 = vmatprep.subr.mxu0 0.0
    %1602 = vmatpush1.msra.mxu0 0.0
    %1603 = vmatprep.subr.mxu0 0.0
    %1604 = vmatpush1.msra.mxu0 0.0
    %1605 = vmatprep.subr.mxu0 0.0
    %1606 = vmatpush1.msra.mxu0 0.0
    %1607 = vmatprep.subr.mxu0 0.0
    %1608 = vmatpush1.msra.mxu0 0.0
    %1609 = vmatprep.subr.mxu0 0.0
    %1610 = vmatpush1.msra.mxu0 0.0
    %1611 = vmatprep.subr.mxu0 0.0
    %1612 = vmatpush1.msra.mxu0 0.0
    %1613 = vmatprep.subr.mxu0 0.0
    %1614 = vmatpush1.msra.mxu0 0.0
    %1615 = vmatprep.subr.mxu0 0.0
    %1616 = vmatpush1.msra.mxu0 0.0
    %1617 = vmatprep.subr.mxu0 0.0
    %1618 = vmatpush1.msra.mxu0 0.0
    %1619 = vmatprep.subr.mxu0 0.0
    %1620 = vmatpush1.msra.mxu0 0.0
    %1621 = vmatprep.subr.mxu0 0.0
    %1622 = vmatpush1.msra.mxu0 0.0
    %1623 = vmatprep.subr.mxu0 0.0
    %1624 = vmatpush1.msra.mxu0 0.0
    %1625 = vmatprep.subr.mxu0 0.0
    %1626 = vmatpush1.msra.mxu0 0.0
    %1627 = vmatprep.subr.mxu0 0.0
    %1628 = vmatpush1.msra.mxu0 0.0
    %1629 = vmatprep.subr.mxu0 0.0
    %1630 = vmatpush1.msra.mxu0 0.0
    %1631 = vmatprep.subr.mxu0 0.0
    %1632 = vmatpush1.msra.mxu0 0.0
    %1633 = vmatprep.subr.mxu0 0.0
    %1634 = vmatpush1.msra.mxu0 0.0
    %1635 = vmatprep.subr.mxu0 0.0
    %1636 = vmatpush1.msra.mxu0 0.0
    %1637 = vmatprep.subr.mxu0 0.0
    %1638 = vmatpush1.msra.mxu0 0.0
    %1639 = vmatprep.subr.mxu0 0.0
    %1640 = vmatpush1.msra.mxu0 0.0
    %1641 = vmatprep.subr.mxu0 0.0
    %1642 = vmatpush1.msra.mxu0 0.0
    %1643 = vmatprep.subr.mxu0 0.0
    %1644 = vmatpush1.msra.mxu0 0.0
    %1645 = vmatprep.subr.mxu0 0.0
    %1646 = vmatpush1.msra.mxu0 0.0
    %1647 = vmatprep.subr.mxu0 0.0
    %1648 = vmatpush1.msra.mxu0 0.0
    %1649 = vmatprep.subr.mxu0 0.0
    %1650 = vmatpush1.msra.mxu0 0.0
    %1651 = vmatprep.subr.mxu0 0.0
    %1652 = vmatpush1.msra.mxu0 0.0
    %1653 = vmatprep.mubr.f32.mxu0 0.0
    %1654 = vmatmul.mubr.f32.gmra.mrb[0].mxu0 %v1587
    %v1655 = vpop.f32.mrb[0].mxu0
    %v1656 = vadd.f32 0.0, %v1655
    %v1657 = vpop.f32.mrb[0].mxu0
    %1658 = vdwg.mxu0
    %v1659 = vadd.f32 %v1156, %v1656
    %v1660 = vxor.u32 %v1659, 2147483648
    %v1661 = vmul.f32 %v1660, 1.442695
    %v1662 = vpow.pop %v1661
    %v1663 = vadd.f32 %v1662, 1.0
    %v1664 = vrcp.pop %v1663
    %v1665 = vmul.f32 1.0, %v1664
    %v1666 = vmul.f32 %v1665, 2.0
    %v1667 = vsub.f32 %v1666, 1.0
    %v1668 = vmul.f32 %v1665, %v1577
    %1670 = vrot.lane.b32.xlu0 %v1667, 64
    %v1671 = vpop.permute.xlu0 %1670
    %v1673 = vmul.f32 %v1665, %v1671
    %1675 = vrot.lane.b32.xlu0 %v1673, 32
    %v1676 = vpop.permute.xlu0 %1675
    %v1678 = vadd.f32 %v1668, %v1676
    %v1679 = vtanh.pop %v1678
    %1681 = vrot.lane.b32.xlu0 %v1679, 64
    %v1682 = vpop.permute.xlu0 %1681
    %v1684 = vmul.f32 %v1665, %v1682
    %1686 = vrot.lane.b32.xlu0 %v1684, 32
    %v1687 = vpop.permute.xlu0 %1686
    %v1688 = vsel %vm100, %v1687, 0
    %1690 = vmatprep.subr.mxu0 0.0
    %1691 = vmatpush1.msra.mxu0 %v1056
    %1692 = vmatprep.subr.mxu0 0.0
    %1693 = vmatpush1.msra.mxu0 %v1057
    %1694 = vmatprep.subr.mxu0 0.0
    %1695 = vmatpush1.msra.mxu0 %v1058
    %1696 = vmatprep.subr.mxu0 0.0
    %1697 = vmatpush1.msra.mxu0 %v1059
    %1698 = vmatprep.subr.mxu0 0.0
    %1699 = vmatpush1.msra.mxu0 0.0
    %1700 = vmatprep.subr.mxu0 0.0
    %1701 = vmatpush1.msra.mxu0 0.0
    %1702 = vmatprep.subr.mxu0 0.0
    %1703 = vmatpush1.msra.mxu0 0.0
    %1704 = vmatprep.subr.mxu0 0.0
    %1705 = vmatpush1.msra.mxu0 0.0
    %1706 = vmatprep.subr.mxu0 0.0
    %1707 = vmatpush1.msra.mxu0 0.0
    %1708 = vmatprep.subr.mxu0 0.0
    %1709 = vmatpush1.msra.mxu0 0.0
    %1710 = vmatprep.subr.mxu0 0.0
    %1711 = vmatpush1.msra.mxu0 0.0
    %1712 = vmatprep.subr.mxu0 0.0
    %1713 = vmatpush1.msra.mxu0 0.0
    %1714 = vmatprep.subr.mxu0 0.0
    %1715 = vmatpush1.msra.mxu0 0.0
    %1716 = vmatprep.subr.mxu0 0.0
    %1717 = vmatpush1.msra.mxu0 0.0
    %1718 = vmatprep.subr.mxu0 0.0
    %1719 = vmatpush1.msra.mxu0 0.0
    %1720 = vmatprep.subr.mxu0 0.0
    %1721 = vmatpush1.msra.mxu0 0.0
    %1722 = vmatprep.subr.mxu0 0.0
    %1723 = vmatpush1.msra.mxu0 0.0
    %1724 = vmatprep.subr.mxu0 0.0
    %1725 = vmatpush1.msra.mxu0 0.0
    %1726 = vmatprep.subr.mxu0 0.0
    %1727 = vmatpush1.msra.mxu0 0.0
    %1728 = vmatprep.subr.mxu0 0.0
    %1729 = vmatpush1.msra.mxu0 0.0
    %1730 = vmatprep.subr.mxu0 0.0
    %1731 = vmatpush1.msra.mxu0 0.0
    %1732 = vmatprep.subr.mxu0 0.0
    %1733 = vmatpush1.msra.mxu0 0.0
    %1734 = vmatprep.subr.mxu0 0.0
    %1735 = vmatpush1.msra.mxu0 0.0
    %1736 = vmatprep.subr.mxu0 0.0
    %1737 = vmatpush1.msra.mxu0 0.0
    %1738 = vmatprep.subr.mxu0 0.0
    %1739 = vmatpush1.msra.mxu0 0.0
    %1740 = vmatprep.subr.mxu0 0.0
    %1741 = vmatpush1.msra.mxu0 0.0
    %1742 = vmatprep.subr.mxu0 0.0
    %1743 = vmatpush1.msra.mxu0 0.0
    %1744 = vmatprep.subr.mxu0 0.0
    %1745 = vmatpush1.msra.mxu0 0.0
    %1746 = vmatprep.subr.mxu0 0.0
    %1747 = vmatpush1.msra.mxu0 0.0
    %1748 = vmatprep.subr.mxu0 0.0
    %1749 = vmatpush1.msra.mxu0 0.0
    %1750 = vmatprep.subr.mxu0 0.0
    %1751 = vmatpush1.msra.mxu0 0.0
    %1752 = vmatprep.subr.mxu0 0.0
    %1753 = vmatpush1.msra.mxu0 0.0
    %1754 = vmatprep.mubr.f32.mxu0 0.0
    %1755 = vmatmul.mubr.f32.gmra.mrb[0].mxu0 %v1688
    %v1756 = vpop.f32.mrb[0].mxu0
    %v1757 = vadd.f32 0.0, %v1756
    %v1758 = vpop.f32.mrb[0].mxu0
    %1759 = vdwg.mxu0
    %v1760 = vadd.f32 %v1161, %v1757
    %v1761 = vxor.u32 %v1760, 2147483648
    %v1762 = vmul.f32 %v1761, 1.442695
    %v1763 = vpow.pop %v1762
    %v1764 = vadd.f32 %v1763, 1.0
    %v1765 = vrcp.pop %v1764
    %v1766 = vmul.f32 1.0, %v1765
    %v1767 = vmul.f32 %v1766, 2.0
    %v1768 = vsub.f32 %v1767, 1.0
    %v1769 = vmul.f32 %v1766, %v1678
    %1771 = vrot.lane.b32.xlu0 %v1768, 64
    %v1772 = vpop.permute.xlu0 %1771
    %v1774 = vmul.f32 %v1766, %v1772
    %1776 = vrot.lane.b32.xlu0 %v1774, 32
    %v1777 = vpop.permute.xlu0 %1776
    %v1779 = vadd.f32 %v1769, %v1777
    %v1780 = vtanh.pop %v1779
    %1782 = vrot.lane.b32.xlu0 %v1780, 64
    %v1783 = vpop.permute.xlu0 %1782
    %v1785 = vmul.f32 %v1766, %v1783
    %1787 = vrot.lane.b32.xlu0 %v1785, 32
    %v1788 = vpop.permute.xlu0 %1787
    %v1789 = vsel %vm100, %v1788, 0
    %1791 = vmatprep.subr.mxu0 0.0
    %1792 = vmatpush1.msra.mxu0 %v1056
    %1793 = vmatprep.subr.mxu0 0.0
    %1794 = vmatpush1.msra.mxu0 %v1057
    %1795 = vmatprep.subr.mxu0 0.0
    %1796 = vmatpush1.msra.mxu0 %v1058
    %1797 = vmatprep.subr.mxu0 0.0
    %1798 = vmatpush1.msra.mxu0 %v1059
    %1799 = vmatprep.subr.mxu0 0.0
    %1800 = vmatpush1.msra.mxu0 0.0
    %1801 = vmatprep.subr.mxu0 0.0
    %1802 = vmatpush1.msra.mxu0 0.0
    %1803 = vmatprep.subr.mxu0 0.0
    %1804 = vmatpush1.msra.mxu0 0.0
    %1805 = vmatprep.subr.mxu0 0.0
    %1806 = vmatpush1.msra.mxu0 0.0
    %1807 = vmatprep.subr.mxu0 0.0
    %1808 = vmatpush1.msra.mxu0 0.0
    %1809 = vmatprep.subr.mxu0 0.0
    %1810 = vmatpush1.msra.mxu0 0.0
    %1811 = vmatprep.subr.mxu0 0.0
    %1812 = vmatpush1.msra.mxu0 0.0
    %1813 = vmatprep.subr.mxu0 0.0
    %1814 = vmatpush1.msra.mxu0 0.0
    %1815 = vmatprep.subr.mxu0 0.0
    %1816 = vmatpush1.msra.mxu0 0.0
    %1817 = vmatprep.subr.mxu0 0.0
    %1818 = vmatpush1.msra.mxu0 0.0
    %1819 = vmatprep.subr.mxu0 0.0
    %1820 = vmatpush1.msra.mxu0 0.0
    %1821 = vmatprep.subr.mxu0 0.0
    %1822 = vmatpush1.msra.mxu0 0.0
    %1823 = vmatprep.subr.mxu0 0.0
    %1824 = vmatpush1.msra.mxu0 0.0
    %1825 = vmatprep.subr.mxu0 0.0
    %1826 = vmatpush1.msra.mxu0 0.0
    %1827 = vmatprep.subr.mxu0 0.0
    %1828 = vmatpush1.msra.mxu0 0.0
    %1829 = vmatprep.subr.mxu0 0.0
    %1830 = vmatpush1.msra.mxu0 0.0
    %1831 = vmatprep.subr.mxu0 0.0
    %1832 = vmatpush1.msra.mxu0 0.0
    %1833 = vmatprep.subr.mxu0 0.0
    %1834 = vmatpush1.msra.mxu0 0.0
    %1835 = vmatprep.subr.mxu0 0.0
    %1836 = vmatpush1.msra.mxu0 0.0
    %1837 = vmatprep.subr.mxu0 0.0
    %1838 = vmatpush1.msra.mxu0 0.0
    %1839 = vmatprep.subr.mxu0 0.0
    %1840 = vmatpush1.msra.mxu0 0.0
    %1841 = vmatprep.subr.mxu0 0.0
    %1842 = vmatpush1.msra.mxu0 0.0
    %1843 = vmatprep.subr.mxu0 0.0
    %1844 = vmatpush1.msra.mxu0 0.0
    %1845 = vmatprep.subr.mxu0 0.0
    %1846 = vmatpush1.msra.mxu0 0.0
    %1847 = vmatprep.subr.mxu0 0.0
    %1848 = vmatpush1.msra.mxu0 0.0
    %1849 = vmatprep.subr.mxu0 0.0
    %1850 = vmatpush1.msra.mxu0 0.0
    %1851 = vmatprep.subr.mxu0 0.0
    %1852 = vmatpush1.msra.mxu0 0.0
    %1853 = vmatprep.subr.mxu0 0.0
    %1854 = vmatpush1.msra.mxu0 0.0
    %1855 = vmatprep.mubr.f32.mxu0 0.0
    %1856 = vmatmul.mubr.f32.gmra.mrb[0].mxu0 %v1789
    %v1857 = vpop.f32.mrb[0].mxu0
    %v1858 = vadd.f32 0.0, %v1857
    %v1859 = vpop.f32.mrb[0].mxu0
    %1860 = vdwg.mxu0
    %v1861 = vadd.f32 %v1166, %v1858
    %v1862 = vxor.u32 %v1861, 2147483648
    %v1863 = vmul.f32 %v1862, 1.442695
    %v1864 = vpow.pop %v1863
    %v1865 = vadd.f32 %v1864, 1.0
    %v1866 = vrcp.pop %v1865
    %v1867 = vmul.f32 1.0, %v1866
    %v1868 = vmul.f32 %v1867, 2.0
    %v1869 = vsub.f32 %v1868, 1.0
    %v1870 = vmul.f32 %v1867, %v1779
    %1872 = vrot.lane.b32.xlu0 %v1869, 64
    %v1873 = vpop.permute.xlu0 %1872
    %v1875 = vmul.f32 %v1867, %v1873
    %1877 = vrot.lane.b32.xlu0 %v1875, 32
    %v1878 = vpop.permute.xlu0 %1877
    %v1880 = vadd.f32 %v1870, %v1878
    %v1881 = vtanh.pop %v1880
    %1883 = vrot.lane.b32.xlu0 %v1881, 64
    %v1884 = vpop.permute.xlu0 %1883
    %v1886 = vmul.f32 %v1867, %v1884
    %1888 = vrot.lane.b32.xlu0 %v1886, 32
    %v1889 = vpop.permute.xlu0 %1888
    %v1890 = vsel %vm100, %v1889, 0
    %1892 = vmatprep.subr.mxu0 0.0
    %1893 = vmatpush1.msra.mxu0 %v1056
    %1894 = vmatprep.subr.mxu0 0.0
    %1895 = vmatpush1.msra.mxu0 %v1057
    %1896 = vmatprep.subr.mxu0 0.0
    %1897 = vmatpush1.msra.mxu0 %v1058
    %1898 = vmatprep.subr.mxu0 0.0
    %1899 = vmatpush1.msra.mxu0 %v1059
    %1900 = vmatprep.subr.mxu0 0.0
    %1901 = vmatpush1.msra.mxu0 0.0
    %1902 = vmatprep.subr.mxu0 0.0
    %1903 = vmatpush1.msra.mxu0 0.0
    %1904 = vmatprep.subr.mxu0 0.0
    %1905 = vmatpush1.msra.mxu0 0.0
    %1906 = vmatprep.subr.mxu0 0.0
    %1907 = vmatpush1.msra.mxu0 0.0
    %1908 = vmatprep.subr.mxu0 0.0
    %1909 = vmatpush1.msra.mxu0 0.0
    %1910 = vmatprep.subr.mxu0 0.0
    %1911 = vmatpush1.msra.mxu0 0.0
    %1912 = vmatprep.subr.mxu0 0.0
    %1913 = vmatpush1.msra.mxu0 0.0
    %1914 = vmatprep.subr.mxu0 0.0
    %1915 = vmatpush1.msra.mxu0 0.0
    %1916 = vmatprep.subr.mxu0 0.0
    %1917 = vmatpush1.msra.mxu0 0.0
    %1918 = vmatprep.subr.mxu0 0.0
    %1919 = vmatpush1.msra.mxu0 0.0
    %1920 = vmatprep.subr.mxu0 0.0
    %1921 = vmatpush1.msra.mxu0 0.0
    %1922 = vmatprep.subr.mxu0 0.0
    %1923 = vmatpush1.msra.mxu0 0.0
    %1924 = vmatprep.subr.mxu0 0.0
    %1925 = vmatpush1.msra.mxu0 0.0
    %1926 = vmatprep.subr.mxu0 0.0
    %1927 = vmatpush1.msra.mxu0 0.0
    %1928 = vmatprep.subr.mxu0 0.0
    %1929 = vmatpush1.msra.mxu0 0.0
    %1930 = vmatprep.subr.mxu0 0.0
    %1931 = vmatpush1.msra.mxu0 0.0
    %1932 = vmatprep.subr.mxu0 0.0
    %1933 = vmatpush1.msra.mxu0 0.0
    %1934 = vmatprep.subr.mxu0 0.0
    %1935 = vmatpush1.msra.mxu0 0.0
    %1936 = vmatprep.subr.mxu0 0.0
    %1937 = vmatpush1.msra.mxu0 0.0
    %1938 = vmatprep.subr.mxu0 0.0
    %1939 = vmatpush1.msra.mxu0 0.0
    %1940 = vmatprep.subr.mxu0 0.0
    %1941 = vmatpush1.msra.mxu0 0.0
    %1942 = vmatprep.subr.mxu0 0.0
    %1943 = vmatpush1.msra.mxu0 0.0
    %1944 = vmatprep.subr.mxu0 0.0
    %1945 = vmatpush1.msra.mxu0 0.0
    %1946 = vmatprep.subr.mxu0 0.0
    %1947 = vmatpush1.msra.mxu0 0.0
    %1948 = vmatprep.subr.mxu0 0.0
    %1949 = vmatpush1.msra.mxu0 0.0
    %1950 = vmatprep.subr.mxu0 0.0
    %1951 = vmatpush1.msra.mxu0 0.0
    %1952 = vmatprep.subr.mxu0 0.0
    %1953 = vmatpush1.msra.mxu0 0.0
    %1954 = vmatprep.subr.mxu0 0.0
    %1955 = vmatpush1.msra.mxu0 0.0
    %1956 = vmatprep.mubr.f32.mxu0 0.0
    %1957 = vmatmul.mubr.f32.gmra.mrb[0].mxu0 %v1890
    %v1958 = vpop.f32.mrb[0].mxu0
    %v1959 = vadd.f32 0.0, %v1958
    %v1960 = vpop.f32.mrb[0].mxu0
    %1961 = vdwg.mxu0
    %v1962 = vadd.f32 %v1171, %v1959
    %v1963 = vxor.u32 %v1962, 2147483648
    %v1964 = vmul.f32 %v1963, 1.442695
    %v1965 = vpow.pop %v1964
    %v1966 = vadd.f32 %v1965, 1.0
    %v1967 = vrcp.pop %v1966
    %v1968 = vmul.f32 1.0, %v1967
    %v1969 = vmul.f32 %v1968, 2.0
    %v1970 = vsub.f32 %v1969, 1.0
    %v1971 = vmul.f32 %v1968, %v1880
    %1973 = vrot.lane.b32.xlu0 %v1970, 64
    %v1974 = vpop.permute.xlu0 %1973
    %v1976 = vmul.f32 %v1968, %v1974
    %1978 = vrot.lane.b32.xlu0 %v1976, 32
    %v1979 = vpop.permute.xlu0 %1978
    %v1981 = vadd.f32 %v1971, %v1979
    %v1982 = vtanh.pop %v1981
    %1984 = vrot.lane.b32.xlu0 %v1982, 64
    %v1985 = vpop.permute.xlu0 %1984
    %v1987 = vmul.f32 %v1968, %v1985
    %1989 = vrot.lane.b32.xlu0 %v1987, 32
    %v1990 = vpop.permute.xlu0 %1989
    %s1992 = scalar_lea.vmem [#allocation8], 8
    %1993 = vst.msk [vmem:[%s1992] sm:$0xff] %vm100, %v1990
    %1995 = vrot.lane.b32.xlu0 %v1981, 96
    %v1996 = vpop.permute.xlu0 %1995
    %s1998 = scalar_lea.vmem [#allocation10], 8
    %1999 = vst.msk [vmem:[%s1998] sm:$0xff] %vm100, %v1996
    %v2000 = vld [vmem:[%s1] sm:$0xff]
    %v2001 = vld [vmem:[%s10] sm:$0xff]
    %v2002 = vld [vmem:[%s10 + $0x8] sm:$0xff]
    %v2003 = vld [vmem:[%s10 + $0x10] sm:$0xff]
    %v2004 = vld [vmem:[%s10 + $0x18] sm:$0xff]
    %v2005 = vld [vmem:[%s11] sm:$0xf]
    %vm2006 = vcmask 31744
    %v2008 = vsel %vm2006, %v2000, 0
    %vm2010 = vcmask 1043456
    %v2012 = vsel %vm2010, %v2005, 0
    %2014 = vmatprep.subr.mxu0 0.0
    %2015 = vmatpush1.msra.mxu0 %v2012
    %2016 = vmatprep.subr.mxu0 0.0
    %2017 = vmatpush1.msra.mxu0 0.0
    %2018 = vmatprep.subr.mxu0 0.0
    %2019 = vmatpush1.msra.mxu0 0.0
    %2020 = vmatprep.subr.mxu0 0.0
    %2021 = vmatpush1.msra.mxu0 0.0
    %2022 = vmatprep.subr.mxu0 0.0
    %2023 = vmatpush1.msra.mxu0 0.0
    %2024 = vmatprep.subr.mxu0 0.0
    %2025 = vmatpush1.msra.mxu0 0.0
    %2026 = vmatprep.subr.mxu0 0.0
    %2027 = vmatpush1.msra.mxu0 0.0
    %2028 = vmatprep.subr.mxu0 0.0
    %2029 = vmatpush1.msra.mxu0 0.0
    %2030 = vmatprep.subr.mxu0 0.0
    %2031 = vmatpush1.msra.mxu0 0.0
    %2032 = vmatprep.subr.mxu0 0.0
    %2033 = vmatpush1.msra.mxu0 0.0
    %2034 = vmatprep.subr.mxu0 0.0
    %2035 = vmatpush1.msra.mxu0 0.0
    %2036 = vmatprep.subr.mxu0 0.0
    %2037 = vmatpush1.msra.mxu0 0.0
    %2038 = vmatprep.subr.mxu0 0.0
    %2039 = vmatpush1.msra.mxu0 0.0
    %2040 = vmatprep.subr.mxu0 0.0
    %2041 = vmatpush1.msra.mxu0 0.0
    %2042 = vmatprep.subr.mxu0 0.0
    %2043 = vmatpush1.msra.mxu0 0.0
    %2044 = vmatprep.subr.mxu0 0.0
    %2045 = vmatpush1.msra.mxu0 0.0
    %2046 = vmatprep.subr.mxu0 0.0
    %2047 = vmatpush1.msra.mxu0 0.0
    %2048 = vmatprep.subr.mxu0 0.0
    %2049 = vmatpush1.msra.mxu0 0.0
    %2050 = vmatprep.subr.mxu0 0.0
    %2051 = vmatpush1.msra.mxu0 0.0
    %2052 = vmatprep.subr.mxu0 0.0
    %2053 = vmatpush1.msra.mxu0 0.0
    %2054 = vmatprep.subr.mxu0 0.0
    %2055 = vmatpush1.msra.mxu0 0.0
    %2056 = vmatprep.subr.mxu0 0.0
    %2057 = vmatpush1.msra.mxu0 0.0
    %2058 = vmatprep.subr.mxu0 0.0
    %2059 = vmatpush1.msra.mxu0 0.0
    %2060 = vmatprep.subr.mxu0 0.0
    %2061 = vmatpush1.msra.mxu0 0.0
    %2062 = vmatprep.subr.mxu0 0.0
    %2063 = vmatpush1.msra.mxu0 0.0
    %2064 = vmatprep.subr.mxu0 0.0
    %2065 = vmatpush1.msra.mxu0 0.0
    %2066 = vmatprep.subr.mxu0 0.0
    %2067 = vmatpush1.msra.mxu0 0.0
    %2068 = vmatprep.subr.mxu0 0.0
    %2069 = vmatpush1.msra.mxu0 0.0
    %2070 = vmatprep.subr.mxu0 0.0
    %2071 = vmatpush1.msra.mxu0 0.0
    %2072 = vmatprep.subr.mxu0 0.0
    %2073 = vmatpush1.msra.mxu0 0.0
    %2074 = vmatprep.subr.mxu0 0.0
    %2075 = vmatpush1.msra.mxu0 0.0
    %2076 = vmatprep.subr.mxu0 0.0
    %2077 = vmatpush1.msra.mxu0 0.0
    %2078 = vmatprep.mubr.f32.mxu0 0.0
    %2079 = vmatmul.mubr.f32.gmra.mrb[0].mxu0 %v2008
    %v2080 = vpop.f32.mrb[0].mxu0
    %v2081 = vadd.f32 0.0, %v2080
    %v2082 = vpop.f32.mrb[0].mxu0
    %2083 = vdwg.mxu0
    %v2084 = vsel %vm100, %v1990, 0
    %2086 = vmatprep.subr.mxu0 0.0
    %2087 = vmatpush1.msra.mxu0 %v2001
    %2088 = vmatprep.subr.mxu0 0.0
    %2089 = vmatpush1.msra.mxu0 %v2002
    %2090 = vmatprep.subr.mxu0 0.0
    %2091 = vmatpush1.msra.mxu0 %v2003
    %2092 = vmatprep.subr.mxu0 0.0
    %2093 = vmatpush1.msra.mxu0 %v2004
    %2094 = vmatprep.subr.mxu0 0.0
    %2095 = vmatpush1.msra.mxu0 0.0
    %2096 = vmatprep.subr.mxu0 0.0
    %2097 = vmatpush1.msra.mxu0 0.0
    %2098 = vmatprep.subr.mxu0 0.0
    %2099 = vmatpush1.msra.mxu0 0.0
    %2100 = vmatprep.subr.mxu0 0.0
    %2101 = vmatpush1.msra.mxu0 0.0
    %2102 = vmatprep.subr.mxu0 0.0
    %2103 = vmatpush1.msra.mxu0 0.0
    %2104 = vmatprep.subr.mxu0 0.0
    %2105 = vmatpush1.msra.mxu0 0.0
    %2106 = vmatprep.subr.mxu0 0.0
    %2107 = vmatpush1.msra.mxu0 0.0
    %2108 = vmatprep.subr.mxu0 0.0
    %2109 = vmatpush1.msra.mxu0 0.0
    %2110 = vmatprep.subr.mxu0 0.0
    %2111 = vmatpush1.msra.mxu0 0.0
    %2112 = vmatprep.subr.mxu0 0.0
    %2113 = vmatpush1.msra.mxu0 0.0
    %2114 = vmatprep.subr.mxu0 0.0
    %2115 = vmatpush1.msra.mxu0 0.0
    %2116 = vmatprep.subr.mxu0 0.0
    %2117 = vmatpush1.msra.mxu0 0.0
    %2118 = vmatprep.subr.mxu0 0.0
    %2119 = vmatpush1.msra.mxu0 0.0
    %2120 = vmatprep.subr.mxu0 0.0
    %2121 = vmatpush1.msra.mxu0 0.0
    %2122 = vmatprep.subr.mxu0 0.0
    %2123 = vmatpush1.msra.mxu0 0.0
    %2124 = vmatprep.subr.mxu0 0.0
    %2125 = vmatpush1.msra.mxu0 0.0
    %2126 = vmatprep.subr.mxu0 0.0
    %2127 = vmatpush1.msra.mxu0 0.0
    %2128 = vmatprep.subr.mxu0 0.0
    %2129 = vmatpush1.msra.mxu0 0.0
    %2130 = vmatprep.subr.mxu0 0.0
    %2131 = vmatpush1.msra.mxu0 0.0
    %2132 = vmatprep.subr.mxu0 0.0
    %2133 = vmatpush1.msra.mxu0 0.0
    %2134 = vmatprep.subr.mxu0 0.0
    %2135 = vmatpush1.msra.mxu0 0.0
    %2136 = vmatprep.subr.mxu0 0.0
    %2137 = vmatpush1.msra.mxu0 0.0
    %2138 = vmatprep.subr.mxu0 0.0
    %2139 = vmatpush1.msra.mxu0 0.0
    %2140 = vmatprep.subr.mxu0 0.0
    %2141 = vmatpush1.msra.mxu0 0.0
    %2142 = vmatprep.subr.mxu0 0.0
    %2143 = vmatpush1.msra.mxu0 0.0
    %2144 = vmatprep.subr.mxu0 0.0
    %2145 = vmatpush1.msra.mxu0 0.0
    %2146 = vmatprep.subr.mxu0 0.0
    %2147 = vmatpush1.msra.mxu0 0.0
    %2148 = vmatprep.subr.mxu0 0.0
    %2149 = vmatpush1.msra.mxu0 0.0
    %2150 = vmatprep.mubr.f32.mxu0 0.0
    %2151 = vmatmul.mubr.f32.gmra.mrb[0].mxu0 %v2084
    %v2152 = vpop.f32.mrb[0].mxu0
    %v2153 = vadd.f32 %v2081, %v2152
    %v2154 = vpop.f32.mrb[0].mxu0
    %2155 = vdwg.mxu0
    %v2156 = vld [vmem:[%s12] sm:$0x1]
    %v2158 = vlaneseq
    %v2159 = vshrl.u32 %v2158, 7
    %v2160 = vsub.s32 0, %v2159
    %v2161 = vrot.slane %v2156, %v2160
    %v2163 = vadd.f32 %v2153, %v2161
    %v2164 = vxor.u32 %v2163, 2147483648
    %v2165 = vmul.f32 %v2164, 1.442695
    %v2166 = vpow.pop %v2165
    %v2167 = vadd.f32 %v2166, 1.0
    %v2168 = vrcp.pop %v2167
    %v2169 = vmul.f32 1.0, %v2168
    %vm2170 = vcmask 64512
    %2171 = vst.msk [vmem:[#allocation7] sm:$0xff] %vm2170, %v2169
    // Predicated region
    $region62: #{tpu_custom_call.1} parent=1 // pred_check
      _
    $region63: #{tpu_custom_call.1} parent=1 // pred_check_branch
      %2173 = sbr.rel (0) target = $region65
    $region64: #{tpu_custom_call.1} parent=1 // pred_region
      %s2175 = ssub.s32 128, 128
      %2176 = vsyncadd [#allocation4], %s2175
      %s2178 = sshll.u32 [#allocation7], 4
      %s2179 = int_to_ptr.vmem [resolvable:$true] %s2178
      %2181 = dma.vmem_to_hbm [thread:$0]  %s2179, 128, %s13, [#allocation4]
    $region65: #{tpu_custom_call.1} parent=1 // pred_fallthru
      _
    // Predicated region
    $region66: #{tpu_custom_call.1} parent=1 // pred_check
      _
    $region67: #{tpu_custom_call.1} parent=1 // pred_check_branch
      %2183 = sbr.rel (0) target = $region69
    $region68: #{tpu_custom_call.1} parent=1 // pred_region
      %s2185 = ssub.s32 256, 256
      %2186 = vsyncadd [#allocation9], %s2185
      %s2187 = sshll.u32 [#allocation8], 4
      %s2188 = int_to_ptr.vmem [resolvable:$true] %s2187
      %2193 = dma.vmem_to_hbm [thread:$0]  %s2188, 256, %s14, [#allocation9], 128, 128, 8
    $region69: #{tpu_custom_call.1} parent=1 // pred_fallthru
      _
    // Predicated region
    $region70: #{tpu_custom_call.1} parent=1 // pred_check
      _
    $region71: #{tpu_custom_call.1} parent=1 // pred_check_branch
      %2195 = sbr.rel (0) target = $region73
    $region72: #{tpu_custom_call.1} parent=1 // pred_region
      %s2197 = ssub.s32 256, 256
      %2198 = vsyncadd [#allocation9], %s2197
      %s2199 = sshll.u32 [#allocation10], 4
      %s2200 = int_to_ptr.vmem [resolvable:$true] %s2199
      %2205 = dma.vmem_to_hbm [thread:$0]  %s2200, 256, %s15, [#allocation9], 128, 128, 8
    $region73: #{tpu_custom_call.1} parent=1 // pred_fallthru
      _
    // Predicated region
    $region74: #{tpu_custom_call.1} parent=1 // pred_check
      _
    $region75: #{tpu_custom_call.1} parent=1 // pred_check_branch
      %2207 = sbr.rel (0) target = $region77
    $region76: #{tpu_custom_call.1} parent=1 // pred_region
      %2208 = dma.done [#allocation4], 128
    $region77: #{tpu_custom_call.1} parent=1 // pred_fallthru
      _
    // Predicated region
    $region78: #{tpu_custom_call.1} parent=1 // pred_check
      _
    $region79: #{tpu_custom_call.1} parent=1 // pred_check_branch
      %2210 = sbr.rel (0) target = $region81
    $region80: #{tpu_custom_call.1} parent=1 // pred_region
      %2211 = dma.done [#allocation9], 256
    $region81: #{tpu_custom_call.1} parent=1 // pred_fallthru
      _
    // Predicated region
    $region82: #{tpu_custom_call.1} parent=1 // pred_check
      _
    $region83: #{tpu_custom_call.1} parent=1 // pred_check_branch
      %2213 = sbr.rel (0) target = $region85
    $region84: #{tpu_custom_call.1} parent=1 // pred_region
      %2214 = dma.done [#allocation9], 256
    $region85: #{tpu_custom_call.1} parent=1 // pred_fallthru
      _
    %2215 = vsyncpa [#allocation3], 1
    %2216 = vsyncpa [#allocation6], 1
    %2217 = vsyncpa [#allocation4], 1
    %2218 = vsyncpa [#allocation9], 1

</llo_original>
